<compile_context>
chip_gen: v5e
topology: v5e:2x2
jax: 0.10.0
libtpu: 0.0.40
codegen_flags: <defaults>
</compile_context>

<pallas_src>
import jax
import jax.numpy as jnp
from jax.experimental import pallas as pl
from jax.experimental.pallas import tpu as pltpu

BN_EPS = 1e-5
_VPU_ADJ_MAX_N = 32   # below this, A@h runs on the VPU instead of the MXU


def _make_kernel(n_gcn, n_q, tb, n_nodes, use_vpu_adj):
    # Flatten (TB, N, F) -> (TB*N, F) only when N is a sublane multiple (f32),
    # so the reshape is tile-aligned (free). Otherwise stay 3-D throughout.
    flatten = (n_nodes % 8 == 0)

    def adj_contract(a, h3):
        # ah[b, i, f] = sum_j a[b, i, j] * h3[b, j, f]
        if use_vpu_adj:
            # Unrolled VPU broadcast-FMA: avoids nearly-empty MXU pushes at
            # tiny N (a stays f32 on this path).
            acc = a[:, :, 0:1].astype(jnp.float32) * h3[:, 0:1, :]
            for j in range(1, n_nodes):
                acc = acc + a[:, :, j:j + 1].astype(jnp.float32) * h3[:, j:j + 1, :]
            return acc
        # MXU path (large N): a (and h) are already in the MXU dtype.
        return jnp.einsum("bij,bjf->bif", a, h3.astype(a.dtype),
                          preferred_element_type=jnp.float32)

    def kernel(*refs):
        idx = 0
        state_ref = refs[idx]; idx += 1            # (TB, N, F0) f32
        adj_ref = refs[idx]; idx += 1              # (TB, N, N)
        scale_ref = refs[idx]; idx += 1            # (1, F0) f32
        shift_ref = refs[idx]; idx += 1            # (1, F0) f32
        gcn_refs = refs[idx: idx + 2 * n_gcn]; idx += 2 * n_gcn
        q_refs = refs[idx: idx + 2 * n_q]; idx += 2 * n_q
        out_ref = refs[idx]                        # flat (TB*N, Q) or (TB, N, Q)

        f0 = state_ref.shape[-1]
        a = adj_ref[...]

        def dense(h_flat, w_ref, b_ref, relu):
            w = w_ref[...]
            y = jnp.dot(h_flat.astype(w.dtype), w,
                        preferred_element_type=jnp.float32) + b_ref[...]
            return jnp.maximum(y, 0.0) if relu else y

        if flatten:
            # Folded BatchNorm on the flat slab (big M dim on the MXU later).
            x = state_ref[...].reshape(tb * n_nodes, f0)
            h = x * scale_ref[...] + shift_ref[...]

            # GraphCNN: h <- relu(A @ h @ W + b)
            for l in range(n_gcn):
                w_ref, b_ref = gcn_refs[2 * l], gcn_refs[2 * l + 1]
                din = w_ref.shape[0]
                ah = adj_contract(a, h.reshape(tb, n_nodes, din))
                h = dense(ah.reshape(tb * n_nodes, din), w_ref, b_ref, True)

            # QNetwork MLP (last layer linear), then unpadded lane store.
            for l in range(n_q):
                h = dense(h, q_refs[2 * l], q_refs[2 * l + 1], l < n_q - 1)

            out_ref[...] = h.astype(out_ref.dtype)
        else:
            # Fallback 3-D path (no tile-aligned flatten available).
            h = state_ref[...] * scale_ref[...] + shift_ref[...]
            for l in range(n_gcn):
                w = gcn_refs[2 * l][...]
                b = gcn_refs[2 * l + 1][...]
                ah = adj_contract(a, h)
                h = jnp.maximum(
                    jnp.einsum("bnf,fg->bng", ah.astype(w.dtype), w,
                               preferred_element_type=jnp.float32) + b, 0.0)
            for l in range(n_q):
                w = q_refs[2 * l][...]
                b = q_refs[2 * l + 1][...]
                h = jnp.einsum("bnf,fg->bng", h.astype(w.dtype), w,
                               preferred_element_type=jnp.float32) + b
                if l < n_q - 1:
                    h = jnp.maximum(h, 0.0)
            out_ref[...] = h.astype(out_ref.dtype)

    return kernel


def _hw_info():
    """(physical VMEM bytes, TensorCores per device) with safe fallbacks."""
    vmem_cap = None
    try:
        info = pltpu.get_tpu_info()
        vmem_cap = getattr(info, "vmem_capacity_bytes", None)
    except Exception:
        vmem_cap = None
    if not vmem_cap:
        vmem_cap = 64 * 1024 * 1024          # conservative: v7x per-core VMEM
    kind = ""
    try:
        kind = jax.devices()[0].device_kind.lower().replace(" ", "")
    except Exception:
        pass
    # Chips presenting 2 TensorCores behind one device (megacore sharding).
    num_tc = 2 if any(t in kind for t in ("v4", "v5p", "v7", "7x")) else 1
    return int(vmem_cap), num_tc


def model_forward(state, adj, bn_params, gcn_params, q_params, *, tb=None,
                  mxu_dtype=jnp.bfloat16):
    """state: (B, N, F0) f32, adj: (B, N, N) f32 -> (B, N, Qout) f32."""
    B, N, F0 = state.shape
    gamma, beta, mean, var = bn_params
    mxu_dtype = jnp.dtype(mxu_dtype)

    # Fold eval-mode BatchNorm into scale/shift (wrapper-side, once).
    scale = (gamma * jax.lax.rsqrt(var + BN_EPS)).astype(jnp.float32)   # (1, F0)
    shift = (beta - mean * scale).astype(jnp.float32)                   # (1, F0)

    q_out = q_params[-1][0].shape[1]
    use_vpu_adj = N <= _VPU_ADJ_MAX_N
    flatten = (N % 8 == 0)

    # MXU matmul operands in bf16 (f32 accumulate); biases/elementwise stay f32.
    gcn_params = [(w.astype(mxu_dtype), b.astype(jnp.float32)) for w, b in gcn_params]
    q_params = [(w.astype(mxu_dtype), b.astype(jnp.float32)) for w, b in q_params]
    if (mxu_dtype != jnp.dtype(jnp.float32)) and (not use_vpu_adj):
        adj = adj.astype(mxu_dtype)          # halve adjacency DMA on the MXU path

    flat_weights = []
    for (w, b) in list(gcn_params) + list(q_params):
        flat_weights.append(w)
        flat_weights.append(b)

    # ---- batch tile selection: hardware-aware VMEM budget ----
    vmem_cap, num_tc = _hw_info()
    if tb is None:
        w_max = max([F0, q_out]
                    + [w.shape[1] for w, _ in gcn_params]
                    + [w.shape[1] for w, _ in q_params])
        adj_bytes = adj.dtype.itemsize
        per_b = (2 * (4 * N * F0 + adj_bytes * N * N)    # double-buffered inputs
                 + 2 * 4 * N * q_out                     # double-buffered output
                 + 4 * N * 3 * w_max)                    # h/ah intermediates + cast temps
        param_bytes = 2 * sum(int(a.size) * a.dtype.itemsize
                              for a in flat_weights + [scale, shift])
        budget = vmem_cap // 2                           # headroom under the limit
        tb = max(1, (budget - param_bytes) // per_b)
        if num_tc > 1:
            # Keep >= 2 grid steps per TensorCore so megacore sharding still
            # has DMA/compute overlap on each core.
            tb = min(tb, max(1, B // (2 * num_tc)))
        tb = min(tb, B)
    tb = int(max(1, tb))

    n_steps = pl.cdiv(B, tb)
    b_padded = n_steps * tb
    if b_padded != B:
        state = jnp.pad(state, ((0, b_padded - B), (0, 0), (0, 0)))
        adj = jnp.pad(adj, ((0, b_padded - B), (0, 0), (0, 0)))

    # Full (untiled) blocks for parameters: block shape == array shape, so no
    # (8, 128) divisibility constraint applies.
    def full_spec(arr):
        nd = arr.ndim
        return pl.BlockSpec(arr.shape, lambda i, _nd=nd: (0,) * _nd)

    in_specs = [
        pl.BlockSpec((tb, N, F0), lambda i: (i, 0, 0)),   # state
        pl.BlockSpec((tb, N, N), lambda i: (i, 0, 0)),    # adjacency
        full_spec(scale), full_spec(shift),
    ] + [full_spec(a) for a in flat_weights]

    if flatten:
        # Unpadded flat output slab: last-two block dims (tb*N, q_out) are a
        # sublane multiple / full extent; only real bytes hit HBM.
        out_shape = jax.ShapeDtypeStruct((b_padded * N, q_out), jnp.float32)
        out_spec = pl.BlockSpec((tb * N, q_out), lambda i: (i, 0))
    else:
        out_shape = jax.ShapeDtypeStruct((b_padded, N, q_out), jnp.float32)
        out_spec = pl.BlockSpec((tb, N, q_out), lambda i: (i, 0, 0))

    kernel = _make_kernel(len(gcn_params), len(q_params), tb, N, use_vpu_adj)

    vmem_limit = int(min(vmem_cap, max(32 * 1024 * 1024, int(vmem_cap * 0.8))))

    out = pl.pallas_call(
        kernel,
        out_shape=out_shape,
        grid_spec=pltpu.PrefetchScalarGridSpec(
            num_scalar_prefetch=0,
            grid=(n_steps,),
            in_specs=in_specs,
            out_specs=out_spec,
        ),
        compiler_params=pltpu.CompilerParams(
            dimension_semantics=("parallel",),
            vmem_limit_bytes=vmem_limit),
    )(state, adj, scale, shift, *flat_weights)

    if flatten:
        out = out.reshape(b_padded, N, q_out)
    return out[:B]


def _reference(state, adj, bn_params, gcn_params, q_params):
    gamma, beta, mean, var = bn_params
    h = (state - mean) * jax.lax.rsqrt(var + BN_EPS) * gamma + beta
    for (w, b) in gcn_params:
        h = jnp.maximum(jnp.einsum("bij,bjf->bif", adj, h) @ w + b, 0.0)
    for i, (w, b) in enumerate(q_params):
        h = h @ w + b
        if i < len(q_params) - 1:
            h = jnp.maximum(h, 0.0)
    return h


if __name__ == "__main__":
    key = jax.random.PRNGKey(0)

    # Small, forward-consistent shapes.
    gcn_layer_dim = [4, 8, 16]     # F0 -> 8 -> 16
    q_layer_dim = [16, 32, 4]      # 16 -> 32 -> 4 Q-values
    B, N, F0 = 16, 8, gcn_layer_dim[0]

    ks = jax.random.split(key, 16)
    state = jax.random.normal(ks[0], (B, N, F0), dtype=jnp.float32)
    adj = jax.random.uniform(ks[1], (B, N, N), dtype=jnp.float32)

    # LinkBatchNorm parameters (deterministic, eval-mode running stats).
    gamma = jnp.ones((1, F0), jnp.float32) * 1.1
    beta = jnp.ones((1, F0), jnp.float32) * 0.05
    mean = jnp.linspace(-0.2, 0.2, F0, dtype=jnp.float32).reshape(1, F0)
    var = jnp.linspace(0.8, 1.2, F0, dtype=jnp.float32).reshape(1, F0)
    bn_params = (gamma, beta, mean, var)

    # GraphCNN weights.
    gcn_params = []
    for i in range(len(gcn_layer_dim) - 1):
        din, dout = gcn_layer_dim[i], gcn_layer_dim[i + 1]
        w = jax.random.normal(ks[2 + i], (din, dout), jnp.float32) * 0.3
        b = jnp.full((1, dout), 0.01, jnp.float32)
        gcn_params.append((w, b))

    # QNetwork weights.
    q_params = []
    for i in range(len(q_layer_dim) - 1):
        din, dout = q_layer_dim[i], q_layer_dim[i + 1]
        w = jax.random.normal(ks[8 + i], (din, dout), jnp.float32) * 0.3
        b = jnp.full((1, dout), -0.02, jnp.float32)
        q_params.append((w, b))

    ref = _reference(state, adj, bn_params, gcn_params, q_params)

    # 1) Default mode: auto batch tile, bf16 MXU inputs (f32 accumulate).
    out = model_forward(state, adj, bn_params, gcn_params, q_params)
    out = jax.block_until_ready(out)
    assert out.shape == (B, N, q_layer_dim[-1])
    assert jnp.allclose(out, ref, atol=1e-1, rtol=5e-2), \
        float(jnp.max(jnp.abs(out - ref)))

    # 2) Exact-parity mode: f32 matmuls, explicit tb=3 to exercise the
    #    multi-step grid and batch-padding path.
    out_f32 = model_forward(state, adj, bn_params, gcn_params, q_params,
                            tb=3, mxu_dtype=jnp.float32)
    out_f32 = jax.block_until_ready(out_f32)
    assert jnp.allclose(out_f32, ref, atol=1e-4, rtol=1e-4), \
        float(jnp.max(jnp.abs(out_f32 - ref)))

    print("KERNEL_OK")
</pallas_src>

<mosaic_0001>
module attributes {stable_mosaic.version = 11 : i64} {
  func.func @kernel(%arg0: i32, %arg1: memref<16x8x4xf32, #tpu.memory_space<vmem>>, %arg2: memref<16x8x8xf32, #tpu.memory_space<vmem>>, %arg3: memref<1x4xf32, #tpu.memory_space<vmem>>, %arg4: memref<1x4xf32, #tpu.memory_space<vmem>>, %arg5: memref<4x8xbf16, #tpu.memory_space<vmem>>, %arg6: memref<1x8xf32, #tpu.memory_space<vmem>>, %arg7: memref<8x16xbf16, #tpu.memory_space<vmem>>, %arg8: memref<1x16xf32, #tpu.memory_space<vmem>>, %arg9: memref<16x32xbf16, #tpu.memory_space<vmem>>, %arg10: memref<1x32xf32, #tpu.memory_space<vmem>>, %arg11: memref<32x4xbf16, #tpu.memory_space<vmem>>, %arg12: memref<1x4xf32, #tpu.memory_space<vmem>>, %arg13: memref<128x4xf32, #tpu.memory_space<vmem>>) attributes {dimension_semantics = [#tpu.dimension_semantics<parallel>], iteration_bounds = array<i64: 1>, scalar_prefetch = 0 : i64, scratch_operands = 0 : i64, tpu.core_type = #tpu.core_type<tc>, window_params = [{transform_indices = @transform_0, window_bounds = array<i64: 16, 8, 4>}, {transform_indices = @transform_1, window_bounds = array<i64: 16, 8, 8>}, {pipeline_mode = #tpu.pipeline_mode<synchronous>, transform_indices = @transform_2, window_bounds = array<i64: 1, 4>}, {pipeline_mode = #tpu.pipeline_mode<synchronous>, transform_indices = @transform_3, window_bounds = array<i64: 1, 4>}, {pipeline_mode = #tpu.pipeline_mode<synchronous>, transform_indices = @transform_4, window_bounds = array<i64: 4, 8>}, {pipeline_mode = #tpu.pipeline_mode<synchronous>, transform_indices = @transform_5, window_bounds = array<i64: 1, 8>}, {pipeline_mode = #tpu.pipeline_mode<synchronous>, transform_indices = @transform_6, window_bounds = array<i64: 8, 16>}, {pipeline_mode = #tpu.pipeline_mode<synchronous>, transform_indices = @transform_7, window_bounds = array<i64: 1, 16>}, {pipeline_mode = #tpu.pipeline_mode<synchronous>, transform_indices = @transform_8, window_bounds = array<i64: 16, 32>}, {pipeline_mode = #tpu.pipeline_mode<synchronous>, transform_indices = @transform_9, window_bounds = array<i64: 1, 32>}, {pipeline_mode = #tpu.pipeline_mode<synchronous>, transform_indices = @transform_10, window_bounds = array<i64: 32, 4>}, {pipeline_mode = #tpu.pipeline_mode<synchronous>, transform_indices = @transform_11, window_bounds = array<i64: 1, 4>}, {transform_indices = @transform_12, window_bounds = array<i64: 128, 4>}]} {
    %c0 = arith.constant 0 : index
    %c0_0 = arith.constant 0 : index
    %c0_1 = arith.constant 0 : index
    %0 = vector.load %arg2[%c0, %c0_0, %c0_1] : memref<16x8x8xf32, #tpu.memory_space<vmem>>, vector<16x8x8xf32>
    %c0_2 = arith.constant 0 : index
    %c0_3 = arith.constant 0 : index
    %c0_4 = arith.constant 0 : index
    %1 = vector.load %arg1[%c0_2, %c0_3, %c0_4] : memref<16x8x4xf32, #tpu.memory_space<vmem>>, vector<16x8x4xf32>
    %2 = vector.shape_cast %1 : vector<16x8x4xf32> to vector<128x4xf32>
    %c0_5 = arith.constant 0 : index
    %c0_6 = arith.constant 0 : index
    %3 = vector.load %arg3[%c0_5, %c0_6] : memref<1x4xf32, #tpu.memory_space<vmem>>, vector<1x4xf32>
    %4 = vector.broadcast %3 : vector<1x4xf32> to vector<128x4xf32>
    %5 = arith.mulf %2, %4 : vector<128x4xf32>
    %c0_7 = arith.constant 0 : index
    %c0_8 = arith.constant 0 : index
    %6 = vector.load %arg4[%c0_7, %c0_8] : memref<1x4xf32, #tpu.memory_space<vmem>>, vector<1x4xf32>
    %7 = vector.broadcast %6 : vector<1x4xf32> to vector<128x4xf32>
    %8 = arith.addf %5, %7 : vector<128x4xf32>
    %9 = vector.shape_cast %8 : vector<128x4xf32> to vector<16x8x4xf32>
    %10 = vector.extract_strided_slice %0 {offsets = [0, 0, 0], sizes = [16, 8, 1], strides = [1, 1, 1]} : vector<16x8x8xf32> to vector<16x8x1xf32>
    %11 = vector.extract_strided_slice %9 {offsets = [0, 0, 0], sizes = [16, 1, 4], strides = [1, 1, 1]} : vector<16x8x4xf32> to vector<16x1x4xf32>
    %12 = vector.broadcast %10 : vector<16x8x1xf32> to vector<16x8x4xf32>
    %13 = vector.broadcast %11 : vector<16x1x4xf32> to vector<16x8x4xf32>
    %14 = arith.mulf %12, %13 : vector<16x8x4xf32>
    %15 = vector.extract_strided_slice %0 {offsets = [0, 0, 1], sizes = [16, 8, 1], strides = [1, 1, 1]} : vector<16x8x8xf32> to vector<16x8x1xf32>
    %16 = vector.extract_strided_slice %9 {offsets = [0, 1, 0], sizes = [16, 1, 4], strides = [1, 1, 1]} : vector<16x8x4xf32> to vector<16x1x4xf32>
    %17 = vector.broadcast %15 : vector<16x8x1xf32> to vector<16x8x4xf32>
    %18 = vector.broadcast %16 : vector<16x1x4xf32> to vector<16x8x4xf32>
    %19 = arith.mulf %17, %18 : vector<16x8x4xf32>
    %20 = arith.addf %14, %19 : vector<16x8x4xf32>
    %21 = vector.extract_strided_slice %0 {offsets = [0, 0, 2], sizes = [16, 8, 1], strides = [1, 1, 1]} : vector<16x8x8xf32> to vector<16x8x1xf32>
    %22 = vector.extract_strided_slice %9 {offsets = [0, 2, 0], sizes = [16, 1, 4], strides = [1, 1, 1]} : vector<16x8x4xf32> to vector<16x1x4xf32>
    %23 = vector.broadcast %21 : vector<16x8x1xf32> to vector<16x8x4xf32>
    %24 = vector.broadcast %22 : vector<16x1x4xf32> to vector<16x8x4xf32>
    %25 = arith.mulf %23, %24 : vector<16x8x4xf32>
    %26 = arith.addf %20, %25 : vector<16x8x4xf32>
    %27 = vector.extract_strided_slice %0 {offsets = [0, 0, 3], sizes = [16, 8, 1], strides = [1, 1, 1]} : vector<16x8x8xf32> to vector<16x8x1xf32>
    %28 = vector.extract_strided_slice %9 {offsets = [0, 3, 0], sizes = [16, 1, 4], strides = [1, 1, 1]} : vector<16x8x4xf32> to vector<16x1x4xf32>
    %29 = vector.broadcast %27 : vector<16x8x1xf32> to vector<16x8x4xf32>
    %30 = vector.broadcast %28 : vector<16x1x4xf32> to vector<16x8x4xf32>
    %31 = arith.mulf %29, %30 : vector<16x8x4xf32>
    %32 = arith.addf %26, %31 : vector<16x8x4xf32>
    %33 = vector.extract_strided_slice %0 {offsets = [0, 0, 4], sizes = [16, 8, 1], strides = [1, 1, 1]} : vector<16x8x8xf32> to vector<16x8x1xf32>
    %34 = vector.extract_strided_slice %9 {offsets = [0, 4, 0], sizes = [16, 1, 4], strides = [1, 1, 1]} : vector<16x8x4xf32> to vector<16x1x4xf32>
    %35 = vector.broadcast %33 : vector<16x8x1xf32> to vector<16x8x4xf32>
    %36 = vector.broadcast %34 : vector<16x1x4xf32> to vector<16x8x4xf32>
    %37 = arith.mulf %35, %36 : vector<16x8x4xf32>
    %38 = arith.addf %32, %37 : vector<16x8x4xf32>
    %39 = vector.extract_strided_slice %0 {offsets = [0, 0, 5], sizes = [16, 8, 1], strides = [1, 1, 1]} : vector<16x8x8xf32> to vector<16x8x1xf32>
    %40 = vector.extract_strided_slice %9 {offsets = [0, 5, 0], sizes = [16, 1, 4], strides = [1, 1, 1]} : vector<16x8x4xf32> to vector<16x1x4xf32>
    %41 = vector.broadcast %39 : vector<16x8x1xf32> to vector<16x8x4xf32>
    %42 = vector.broadcast %40 : vector<16x1x4xf32> to vector<16x8x4xf32>
    %43 = arith.mulf %41, %42 : vector<16x8x4xf32>
    %44 = arith.addf %38, %43 : vector<16x8x4xf32>
    %45 = vector.extract_strided_slice %0 {offsets = [0, 0, 6], sizes = [16, 8, 1], strides = [1, 1, 1]} : vector<16x8x8xf32> to vector<16x8x1xf32>
    %46 = vector.extract_strided_slice %9 {offsets = [0, 6, 0], sizes = [16, 1, 4], strides = [1, 1, 1]} : vector<16x8x4xf32> to vector<16x1x4xf32>
    %47 = vector.broadcast %45 : vector<16x8x1xf32> to vector<16x8x4xf32>
    %48 = vector.broadcast %46 : vector<16x1x4xf32> to vector<16x8x4xf32>
    %49 = arith.mulf %47, %48 : vector<16x8x4xf32>
    %50 = arith.addf %44, %49 : vector<16x8x4xf32>
    %51 = vector.extract_strided_slice %0 {offsets = [0, 0, 7], sizes = [16, 8, 1], strides = [1, 1, 1]} : vector<16x8x8xf32> to vector<16x8x1xf32>
    %52 = vector.extract_strided_slice %9 {offsets = [0, 7, 0], sizes = [16, 1, 4], strides = [1, 1, 1]} : vector<16x8x4xf32> to vector<16x1x4xf32>
    %53 = vector.broadcast %51 : vector<16x8x1xf32> to vector<16x8x4xf32>
    %54 = vector.broadcast %52 : vector<16x1x4xf32> to vector<16x8x4xf32>
    %55 = arith.mulf %53, %54 : vector<16x8x4xf32>
    %56 = arith.addf %50, %55 : vector<16x8x4xf32>
    %57 = vector.shape_cast %56 : vector<16x8x4xf32> to vector<128x4xf32>
    %c0_9 = arith.constant 0 : index
    %c0_10 = arith.constant 0 : index
    %58 = vector.load %arg5[%c0_9, %c0_10] : memref<4x8xbf16, #tpu.memory_space<vmem>>, vector<4x8xbf16>
    %59 = arith.truncf %57 : vector<128x4xf32> to vector<128x4xbf16>
    %cst = arith.constant dense<0.000000e+00> : vector<128x8xf32>
    %60 = tpu.matmul %59, %58, %cst {dimension_numbers = #tpu.dot_dimension_numbers<[1], [0], [0], [1], [0, 0, 1, 1], [], []>} : vector<128x4xbf16>, vector<4x8xbf16>, vector<128x8xf32> -> vector<128x8xf32>
    %c0_11 = arith.constant 0 : index
    %c0_12 = arith.constant 0 : index
    %61 = vector.load %arg6[%c0_11, %c0_12] : memref<1x8xf32, #tpu.memory_space<vmem>>, vector<1x8xf32>
    %62 = vector.broadcast %61 : vector<1x8xf32> to vector<128x8xf32>
    %63 = arith.addf %60, %62 : vector<128x8xf32>
    %cst_13 = arith.constant 0.000000e+00 : f32
    %64 = vector.broadcast %cst_13 : f32 to vector<128x8xf32>
    %65 = arith.maximumf %63, %64 : vector<128x8xf32>
    %66 = vector.shape_cast %65 : vector<128x8xf32> to vector<16x8x8xf32>
    %67 = vector.extract_strided_slice %0 {offsets = [0, 0, 0], sizes = [16, 8, 1], strides = [1, 1, 1]} : vector<16x8x8xf32> to vector<16x8x1xf32>
    %68 = vector.extract_strided_slice %66 {offsets = [0, 0, 0], sizes = [16, 1, 8], strides = [1, 1, 1]} : vector<16x8x8xf32> to vector<16x1x8xf32>
    %69 = vector.broadcast %67 : vector<16x8x1xf32> to vector<16x8x8xf32>
    %70 = vector.broadcast %68 : vector<16x1x8xf32> to vector<16x8x8xf32>
    %71 = arith.mulf %69, %70 : vector<16x8x8xf32>
    %72 = vector.extract_strided_slice %0 {offsets = [0, 0, 1], sizes = [16, 8, 1], strides = [1, 1, 1]} : vector<16x8x8xf32> to vector<16x8x1xf32>
    %73 = vector.extract_strided_slice %66 {offsets = [0, 1, 0], sizes = [16, 1, 8], strides = [1, 1, 1]} : vector<16x8x8xf32> to vector<16x1x8xf32>
    %74 = vector.broadcast %72 : vector<16x8x1xf32> to vector<16x8x8xf32>
    %75 = vector.broadcast %73 : vector<16x1x8xf32> to vector<16x8x8xf32>
    %76 = arith.mulf %74, %75 : vector<16x8x8xf32>
    %77 = arith.addf %71, %76 : vector<16x8x8xf32>
    %78 = vector.extract_strided_slice %0 {offsets = [0, 0, 2], sizes = [16, 8, 1], strides = [1, 1, 1]} : vector<16x8x8xf32> to vector<16x8x1xf32>
    %79 = vector.extract_strided_slice %66 {offsets = [0, 2, 0], sizes = [16, 1, 8], strides = [1, 1, 1]} : vector<16x8x8xf32> to vector<16x1x8xf32>
    %80 = vector.broadcast %78 : vector<16x8x1xf32> to vector<16x8x8xf32>
    %81 = vector.broadcast %79 : vector<16x1x8xf32> to vector<16x8x8xf32>
    %82 = arith.mulf %80, %81 : vector<16x8x8xf32>
    %83 = arith.addf %77, %82 : vector<16x8x8xf32>
    %84 = vector.extract_strided_slice %0 {offsets = [0, 0, 3], sizes = [16, 8, 1], strides = [1, 1, 1]} : vector<16x8x8xf32> to vector<16x8x1xf32>
    %85 = vector.extract_strided_slice %66 {offsets = [0, 3, 0], sizes = [16, 1, 8], strides = [1, 1, 1]} : vector<16x8x8xf32> to vector<16x1x8xf32>
    %86 = vector.broadcast %84 : vector<16x8x1xf32> to vector<16x8x8xf32>
    %87 = vector.broadcast %85 : vector<16x1x8xf32> to vector<16x8x8xf32>
    %88 = arith.mulf %86, %87 : vector<16x8x8xf32>
    %89 = arith.addf %83, %88 : vector<16x8x8xf32>
    %90 = vector.extract_strided_slice %0 {offsets = [0, 0, 4], sizes = [16, 8, 1], strides = [1, 1, 1]} : vector<16x8x8xf32> to vector<16x8x1xf32>
    %91 = vector.extract_strided_slice %66 {offsets = [0, 4, 0], sizes = [16, 1, 8], strides = [1, 1, 1]} : vector<16x8x8xf32> to vector<16x1x8xf32>
    %92 = vector.broadcast %90 : vector<16x8x1xf32> to vector<16x8x8xf32>
    %93 = vector.broadcast %91 : vector<16x1x8xf32> to vector<16x8x8xf32>
    %94 = arith.mulf %92, %93 : vector<16x8x8xf32>
    %95 = arith.addf %89, %94 : vector<16x8x8xf32>
    %96 = vector.extract_strided_slice %0 {offsets = [0, 0, 5], sizes = [16, 8, 1], strides = [1, 1, 1]} : vector<16x8x8xf32> to vector<16x8x1xf32>
    %97 = vector.extract_strided_slice %66 {offsets = [0, 5, 0], sizes = [16, 1, 8], strides = [1, 1, 1]} : vector<16x8x8xf32> to vector<16x1x8xf32>
    %98 = vector.broadcast %96 : vector<16x8x1xf32> to vector<16x8x8xf32>
    %99 = vector.broadcast %97 : vector<16x1x8xf32> to vector<16x8x8xf32>
    %100 = arith.mulf %98, %99 : vector<16x8x8xf32>
    %101 = arith.addf %95, %100 : vector<16x8x8xf32>
    %102 = vector.extract_strided_slice %0 {offsets = [0, 0, 6], sizes = [16, 8, 1], strides = [1, 1, 1]} : vector<16x8x8xf32> to vector<16x8x1xf32>
    %103 = vector.extract_strided_slice %66 {offsets = [0, 6, 0], sizes = [16, 1, 8], strides = [1, 1, 1]} : vector<16x8x8xf32> to vector<16x1x8xf32>
    %104 = vector.broadcast %102 : vector<16x8x1xf32> to vector<16x8x8xf32>
    %105 = vector.broadcast %103 : vector<16x1x8xf32> to vector<16x8x8xf32>
    %106 = arith.mulf %104, %105 : vector<16x8x8xf32>
    %107 = arith.addf %101, %106 : vector<16x8x8xf32>
    %108 = vector.extract_strided_slice %0 {offsets = [0, 0, 7], sizes = [16, 8, 1], strides = [1, 1, 1]} : vector<16x8x8xf32> to vector<16x8x1xf32>
    %109 = vector.extract_strided_slice %66 {offsets = [0, 7, 0], sizes = [16, 1, 8], strides = [1, 1, 1]} : vector<16x8x8xf32> to vector<16x1x8xf32>
    %110 = vector.broadcast %108 : vector<16x8x1xf32> to vector<16x8x8xf32>
    %111 = vector.broadcast %109 : vector<16x1x8xf32> to vector<16x8x8xf32>
    %112 = arith.mulf %110, %111 : vector<16x8x8xf32>
    %113 = arith.addf %107, %112 : vector<16x8x8xf32>
    %114 = vector.shape_cast %113 : vector<16x8x8xf32> to vector<128x8xf32>
    %c0_14 = arith.constant 0 : index
    %c0_15 = arith.constant 0 : index
    %115 = vector.load %arg7[%c0_14, %c0_15] : memref<8x16xbf16, #tpu.memory_space<vmem>>, vector<8x16xbf16>
    %116 = arith.truncf %114 : vector<128x8xf32> to vector<128x8xbf16>
    %cst_16 = arith.constant dense<0.000000e+00> : vector<128x16xf32>
    %117 = tpu.matmul %116, %115, %cst_16 {dimension_numbers = #tpu.dot_dimension_numbers<[1], [0], [0], [1], [0, 0, 1, 1], [], []>} : vector<128x8xbf16>, vector<8x16xbf16>, vector<128x16xf32> -> vector<128x16xf32>
    %c0_17 = arith.constant 0 : index
    %c0_18 = arith.constant 0 : index
    %118 = vector.load %arg8[%c0_17, %c0_18] : memref<1x16xf32, #tpu.memory_space<vmem>>, vector<1x16xf32>
    %119 = vector.broadcast %118 : vector<1x16xf32> to vector<128x16xf32>
    %120 = arith.addf %117, %119 : vector<128x16xf32>
    %cst_19 = arith.constant 0.000000e+00 : f32
    %121 = vector.broadcast %cst_19 : f32 to vector<128x16xf32>
    %122 = arith.maximumf %120, %121 : vector<128x16xf32>
    %c0_20 = arith.constant 0 : index
    %c0_21 = arith.constant 0 : index
    %123 = vector.load %arg9[%c0_20, %c0_21] : memref<16x32xbf16, #tpu.memory_space<vmem>>, vector<16x32xbf16>
    %124 = arith.truncf %122 : vector<128x16xf32> to vector<128x16xbf16>
    %cst_22 = arith.constant dense<0.000000e+00> : vector<128x32xf32>
    %125 = tpu.matmul %124, %123, %cst_22 {dimension_numbers = #tpu.dot_dimension_numbers<[1], [0], [0], [1], [0, 0, 1, 1], [], []>} : vector<128x16xbf16>, vector<16x32xbf16>, vector<128x32xf32> -> vector<128x32xf32>
    %c0_23 = arith.constant 0 : index
    %c0_24 = arith.constant 0 : index
    %126 = vector.load %arg10[%c0_23, %c0_24] : memref<1x32xf32, #tpu.memory_space<vmem>>, vector<1x32xf32>
    %127 = vector.broadcast %126 : vector<1x32xf32> to vector<128x32xf32>
    %128 = arith.addf %125, %127 : vector<128x32xf32>
    %cst_25 = arith.constant 0.000000e+00 : f32
    %129 = vector.broadcast %cst_25 : f32 to vector<128x32xf32>
    %130 = arith.maximumf %128, %129 : vector<128x32xf32>
    %c0_26 = arith.constant 0 : index
    %c0_27 = arith.constant 0 : index
    %131 = vector.load %arg11[%c0_26, %c0_27] : memref<32x4xbf16, #tpu.memory_space<vmem>>, vector<32x4xbf16>
    %132 = arith.truncf %130 : vector<128x32xf32> to vector<128x32xbf16>
    %cst_28 = arith.constant dense<0.000000e+00> : vector<128x4xf32>
    %133 = tpu.matmul %132, %131, %cst_28 {dimension_numbers = #tpu.dot_dimension_numbers<[1], [0], [0], [1], [0, 0, 1, 1], [], []>} : vector<128x32xbf16>, vector<32x4xbf16>, vector<128x4xf32> -> vector<128x4xf32>
    %c0_29 = arith.constant 0 : index
    %c0_30 = arith.constant 0 : index
    %134 = vector.load %arg12[%c0_29, %c0_30] : memref<1x4xf32, #tpu.memory_space<vmem>>, vector<1x4xf32>
    %135 = vector.broadcast %134 : vector<1x4xf32> to vector<128x4xf32>
    %136 = arith.addf %133, %135 : vector<128x4xf32>
    %c0_31 = arith.constant 0 : index
    %c0_32 = arith.constant 0 : index
    %137 = vector.load %arg13[%c0_31, %c0_32] : memref<128x4xf32, #tpu.memory_space<vmem>>, vector<128x4xf32>
    tpu.vector_store %arg13[%c0_31, %c0_32], %136 {strides = array<i32>} : memref<128x4xf32, #tpu.memory_space<vmem>>, vector<128x4xf32>,
    return
  }
  func.func @transform_0(%arg0: i32) -> (i32, i32, i32) {
    %c0_i32 = arith.constant 0 : i32
    %c0_i32_0 = arith.constant 0 : i32
    %c0_i32_1 = arith.constant 0 : i32
    return %arg0, %c0_i32, %c0_i32_0 : i32, i32, i32
  }
  func.func @transform_1(%arg0: i32) -> (i32, i32, i32) {
    %c0_i32 = arith.constant 0 : i32
    %c0_i32_0 = arith.constant 0 : i32
    %c0_i32_1 = arith.constant 0 : i32
    return %arg0, %c0_i32, %c0_i32_0 : i32, i32, i32
  }
  func.func @transform_2(%arg0: i32) -> (i32, i32) {
    %c0_i32 = arith.constant 0 : i32
    %c0_i32_0 = arith.constant 0 : i32
    %c0_i32_1 = arith.constant 0 : i32
    return %c0_i32, %c0_i32_0 : i32, i32
  }
  func.func @transform_3(%arg0: i32) -> (i32, i32) {
    %c0_i32 = arith.constant 0 : i32
    %c0_i32_0 = arith.constant 0 : i32
    %c0_i32_1 = arith.constant 0 : i32
    return %c0_i32, %c0_i32_0 : i32, i32
  }
  func.func @transform_4(%arg0: i32) -> (i32, i32) {
    %c0_i32 = arith.constant 0 : i32
    %c0_i32_0 = arith.constant 0 : i32
    %c0_i32_1 = arith.constant 0 : i32
    return %c0_i32, %c0_i32_0 : i32, i32
  }
  func.func @transform_5(%arg0: i32) -> (i32, i32) {
    %c0_i32 = arith.constant 0 : i32
    %c0_i32_0 = arith.constant 0 : i32
    %c0_i32_1 = arith.constant 0 : i32
    return %c0_i32, %c0_i32_0 : i32, i32
  }
  func.func @transform_6(%arg0: i32) -> (i32, i32) {
    %c0_i32 = arith.constant 0 : i32
    %c0_i32_0 = arith.constant 0 : i32
    %c0_i32_1 = arith.constant 0 : i32
    return %c0_i32, %c0_i32_0 : i32, i32
  }
  func.func @transform_7(%arg0: i32) -> (i32, i32) {
    %c0_i32 = arith.constant 0 : i32
    %c0_i32_0 = arith.constant 0 : i32
    %c0_i32_1 = arith.constant 0 : i32
    return %c0_i32, %c0_i32_0 : i32, i32
  }
  func.func @transform_8(%arg0: i32) -> (i32, i32) {
    %c0_i32 = arith.constant 0 : i32
    %c0_i32_0 = arith.constant 0 : i32
    %c0_i32_1 = arith.constant 0 : i32
    return %c0_i32, %c0_i32_0 : i32, i32
  }
  func.func @transform_9(%arg0: i32) -> (i32, i32) {
    %c0_i32 = arith.constant 0 : i32
    %c0_i32_0 = arith.constant 0 : i32
    %c0_i32_1 = arith.constant 0 : i32
    return %c0_i32, %c0_i32_0 : i32, i32
  }
  func.func @transform_10(%arg0: i32) -> (i32, i32) {
    %c0_i32 = arith.constant 0 : i32
    %c0_i32_0 = arith.constant 0 : i32
    %c0_i32_1 = arith.constant 0 : i32
    return %c0_i32, %c0_i32_0 : i32, i32
  }
  func.func @transform_11(%arg0: i32) -> (i32, i32) {
    %c0_i32 = arith.constant 0 : i32
    %c0_i32_0 = arith.constant 0 : i32
    %c0_i32_1 = arith.constant 0 : i32
    return %c0_i32, %c0_i32_0 : i32, i32
  }
  func.func @transform_12(%arg0: i32) -> (i32, i32) {
    %c0_i32 = arith.constant 0 : i32
    %c0_i32_0 = arith.constant 0 : i32
    return %arg0, %c0_i32 : i32, i32
  }
}

</mosaic_0001>

<llo_original>
// kernel: tpu_custom_call.1
$region0: #{tpu_custom_call.1}
  #allocation0 [shape = 'u32[]', space=smem, size = 0x4, offset = 0x4, fixed_abs, tag = 'smem constant byte address 0x4 - core index']
  #allocation1 [shape = 'u32[72,128]{1,0:T(1,128)}', space=vmem, size = 0x9000, scoped, tag = 'internal scratch']
  %s0 = inlined_call_operand.vmem [shape: f32[16,8,4], index: 0, kind: input, shape index: {}]
  %s1 = inlined_call_operand.vmem [shape: f32[16,8,8], index: 1, kind: input, shape index: {}]
  %s2 = inlined_call_operand.vmem [shape: f32[1,4], index: 2, kind: input, shape index: {}]
  %s3 = inlined_call_operand.vmem [shape: f32[1,4], index: 3, kind: input, shape index: {}]
  %s4 = inlined_call_operand.vmem [shape: bf16[4,8], index: 4, kind: input, shape index: {}]
  %s5 = inlined_call_operand.vmem [shape: f32[1,8], index: 5, kind: input, shape index: {}]
  %s6 = inlined_call_operand.vmem [shape: bf16[8,16], index: 6, kind: input, shape index: {}]
  %s7 = inlined_call_operand.vmem [shape: f32[1,16], index: 7, kind: input, shape index: {}]
  %s8 = inlined_call_operand.vmem [shape: bf16[16,32], index: 8, kind: input, shape index: {}]
  %s9 = inlined_call_operand.vmem [shape: f32[1,32], index: 9, kind: input, shape index: {}]
  %s10 = inlined_call_operand.vmem [shape: bf16[32,4], index: 10, kind: input, shape index: {}]
  %s11 = inlined_call_operand.vmem [shape: f32[1,4], index: 11, kind: input, shape index: {}]
  %s12 = inlined_call_operand.vmem [shape: f32[128,4], index: 12, kind: output, shape index: {}]
  %s13 = sld [smem:[#allocation0]]
  $region58: #{tpu_custom_call.1} parent=0
    _
  %s15 = ssub.s32 1, %s13
  %s16 = scalar_select 0, %s15, %s13
  // Predicated region
  $region2: #{tpu_custom_call.1} parent=0 // pred_check
    _
  $region3: #{tpu_custom_call.1} parent=0 // pred_check_branch
    %18 = sbr.rel (0) target = $region5
  $region4: #{tpu_custom_call.1} parent=0 // pred_region
    _
  $region5: #{tpu_custom_call.1} parent=0 // pred_fallthru
    _
  // Predicated region
  $region6: #{tpu_custom_call.1} parent=0 // pred_check
    _
  $region7: #{tpu_custom_call.1} parent=0 // pred_check_branch
    %20 = sbr.rel (0) target = $region9
  $region8: #{tpu_custom_call.1} parent=0 // pred_region
    _
  $region9: #{tpu_custom_call.1} parent=0 // pred_fallthru
    _
  // Predicated region
  $region10: #{tpu_custom_call.1} parent=0 // pred_check
    _
  $region11: #{tpu_custom_call.1} parent=0 // pred_check_branch
    %22 = sbr.rel (0) target = $region13
  $region12: #{tpu_custom_call.1} parent=0 // pred_region
    _
  $region13: #{tpu_custom_call.1} parent=0 // pred_fallthru
    _
  // Predicated region
  $region14: #{tpu_custom_call.1} parent=0 // pred_check
    _
  $region15: #{tpu_custom_call.1} parent=0 // pred_check_branch
    %24 = sbr.rel (0) target = $region17
  $region16: #{tpu_custom_call.1} parent=0 // pred_region
    _
  $region17: #{tpu_custom_call.1} parent=0 // pred_fallthru
    _
  // Predicated region
  $region18: #{tpu_custom_call.1} parent=0 // pred_check
    _
  $region19: #{tpu_custom_call.1} parent=0 // pred_check_branch
    %26 = sbr.rel (0) target = $region21
  $region20: #{tpu_custom_call.1} parent=0 // pred_region
    _
  $region21: #{tpu_custom_call.1} parent=0 // pred_fallthru
    _
  // Predicated region
  $region22: #{tpu_custom_call.1} parent=0 // pred_check
    _
  $region23: #{tpu_custom_call.1} parent=0 // pred_check_branch
    %28 = sbr.rel (0) target = $region25
  $region24: #{tpu_custom_call.1} parent=0 // pred_region
    _
  $region25: #{tpu_custom_call.1} parent=0 // pred_fallthru
    _
  // Predicated region
  $region26: #{tpu_custom_call.1} parent=0 // pred_check
    _
  $region27: #{tpu_custom_call.1} parent=0 // pred_check_branch
    %30 = sbr.rel (0) target = $region29
  $region28: #{tpu_custom_call.1} parent=0 // pred_region
    _
  $region29: #{tpu_custom_call.1} parent=0 // pred_fallthru
    _
  // Predicated region
  $region30: #{tpu_custom_call.1} parent=0 // pred_check
    _
  $region31: #{tpu_custom_call.1} parent=0 // pred_check_branch
    %32 = sbr.rel (0) target = $region33
  $region32: #{tpu_custom_call.1} parent=0 // pred_region
    _
  $region33: #{tpu_custom_call.1} parent=0 // pred_fallthru
    _
  // Predicated region
  $region34: #{tpu_custom_call.1} parent=0 // pred_check
    _
  $region35: #{tpu_custom_call.1} parent=0 // pred_check_branch
    %34 = sbr.rel (0) target = $region37
  $region36: #{tpu_custom_call.1} parent=0 // pred_region
    _
  $region37: #{tpu_custom_call.1} parent=0 // pred_fallthru
    _
  // Predicated region
  $region38: #{tpu_custom_call.1} parent=0 // pred_check
    _
  $region39: #{tpu_custom_call.1} parent=0 // pred_check_branch
    %36 = sbr.rel (0) target = $region41
  $region40: #{tpu_custom_call.1} parent=0 // pred_region
    _
  $region41: #{tpu_custom_call.1} parent=0 // pred_fallthru
    _
  // Predicated region
  $region42: #{tpu_custom_call.1} parent=0 // pred_check
    _
  $region43: #{tpu_custom_call.1} parent=0 // pred_check_branch
    %38 = sbr.rel (0) target = $region45
  $region44: #{tpu_custom_call.1} parent=0 // pred_region
    _
  $region45: #{tpu_custom_call.1} parent=0 // pred_fallthru
    _
  // Predicated region
  $region46: #{tpu_custom_call.1} parent=0 // pred_check
    _
  $region47: #{tpu_custom_call.1} parent=0 // pred_check_branch
    %40 = sbr.rel (0) target = $region49
  $region48: #{tpu_custom_call.1} parent=0 // pred_region
    _
  $region49: #{tpu_custom_call.1} parent=0 // pred_fallthru
    _
  %v42 = vld [vmem:[%s1] sm:$0xff]
  %v43 = vld [vmem:[%s1 + $0x8] sm:$0xff]
  %v44 = vld [vmem:[%s1 + $0x10] sm:$0xff]
  %v45 = vld [vmem:[%s1 + $0x18] sm:$0xff]
  %v46 = vld [vmem:[%s1 + $0x20] sm:$0xff]
  %v47 = vld [vmem:[%s1 + $0x28] sm:$0xff]
  %v48 = vld [vmem:[%s1 + $0x30] sm:$0xff]
  %v49 = vld [vmem:[%s1 + $0x38] sm:$0xff]
  %v50 = vld [vmem:[%s1 + $0x40] sm:$0xff]
  %v51 = vld [vmem:[%s1 + $0x48] sm:$0xff]
  %v52 = vld [vmem:[%s1 + $0x50] sm:$0xff]
  %v53 = vld [vmem:[%s1 + $0x58] sm:$0xff]
  %v54 = vld [vmem:[%s1 + $0x60] sm:$0xff]
  %v55 = vld [vmem:[%s1 + $0x68] sm:$0xff]
  %v56 = vld [vmem:[%s1 + $0x70] sm:$0xff]
  %v57 = vld [vmem:[%s1 + $0x78] sm:$0xff]
  %v58 = vld [vmem:[%s0] sm:$0xff]
  %v59 = vld [vmem:[%s0 + $0x8] sm:$0xff]
  %v60 = vld [vmem:[%s0 + $0x10] sm:$0xff]
  %v61 = vld [vmem:[%s0 + $0x18] sm:$0xff]
  %v62 = vld [vmem:[%s0 + $0x20] sm:$0xff]
  %v63 = vld [vmem:[%s0 + $0x28] sm:$0xff]
  %v64 = vld [vmem:[%s0 + $0x30] sm:$0xff]
  %v65 = vld [vmem:[%s0 + $0x38] sm:$0xff]
  %v66 = vld [vmem:[%s0 + $0x40] sm:$0xff]
  %v67 = vld [vmem:[%s0 + $0x48] sm:$0xff]
  %v68 = vld [vmem:[%s0 + $0x50] sm:$0xff]
  %v69 = vld [vmem:[%s0 + $0x58] sm:$0xff]
  %v70 = vld [vmem:[%s0 + $0x60] sm:$0xff]
  %v71 = vld [vmem:[%s0 + $0x68] sm:$0xff]
  %v72 = vld [vmem:[%s0 + $0x70] sm:$0xff]
  %v73 = vld [vmem:[%s0 + $0x78] sm:$0xff]
  %v74 = vld [vmem:[%s2] sm:$0x1]
  %v76 = vperm.slane %v74, 0
  %v78 = vmul.f32 %v58, %v76
  %v79 = vmul.f32 %v59, %v76
  %v80 = vmul.f32 %v60, %v76
  %v81 = vmul.f32 %v61, %v76
  %v82 = vmul.f32 %v62, %v76
  %v83 = vmul.f32 %v63, %v76
  %v84 = vmul.f32 %v64, %v76
  %v85 = vmul.f32 %v65, %v76
  %v86 = vmul.f32 %v66, %v76
  %v87 = vmul.f32 %v67, %v76
  %v88 = vmul.f32 %v68, %v76
  %v89 = vmul.f32 %v69, %v76
  %v90 = vmul.f32 %v70, %v76
  %v91 = vmul.f32 %v71, %v76
  %v92 = vmul.f32 %v72, %v76
  %v93 = vmul.f32 %v73, %v76
  %v94 = vld [vmem:[%s3] sm:$0x1]
  %v96 = vperm.slane %v94, 0
  %v98 = vadd.f32 %v78, %v96
  %v99 = vadd.f32 %v79, %v96
  %v100 = vadd.f32 %v80, %v96
  %v101 = vadd.f32 %v81, %v96
  %v102 = vadd.f32 %v82, %v96
  %v103 = vadd.f32 %v83, %v96
  %v104 = vadd.f32 %v84, %v96
  %v105 = vadd.f32 %v85, %v96
  %v106 = vadd.f32 %v86, %v96
  %v107 = vadd.f32 %v87, %v96
  %v108 = vadd.f32 %v88, %v96
  %v109 = vadd.f32 %v89, %v96
  %v110 = vadd.f32 %v90, %v96
  %v111 = vadd.f32 %v91, %v96
  %v112 = vadd.f32 %v92, %v96
  %v113 = vadd.f32 %v93, %v96
  %115 = vset.pattern.permute.xlu0 0
  %116 = vperm.xlu0 %115, %v42
  %v117 = vpop.permute.xlu0 %116
  %120 = vset.pattern.permute.xlu0 0
  %121 = vperm.xlu0 %120, %v43
  %v122 = vpop.permute.xlu0 %121
  %125 = vset.pattern.permute.xlu0 0
  %126 = vperm.xlu0 %125, %v44
  %v127 = vpop.permute.xlu0 %126
  %130 = vset.pattern.permute.xlu0 0
  %131 = vperm.xlu0 %130, %v45
  %v132 = vpop.permute.xlu0 %131
  %135 = vset.pattern.permute.xlu0 0
  %136 = vperm.xlu0 %135, %v46
  %v137 = vpop.permute.xlu0 %136
  %140 = vset.pattern.permute.xlu0 0
  %141 = vperm.xlu0 %140, %v47
  %v142 = vpop.permute.xlu0 %141
  %145 = vset.pattern.permute.xlu0 0
  %146 = vperm.xlu0 %145, %v48
  %v147 = vpop.permute.xlu0 %146
  %150 = vset.pattern.permute.xlu0 0
  %151 = vperm.xlu0 %150, %v49
  %v152 = vpop.permute.xlu0 %151
  %155 = vset.pattern.permute.xlu0 0
  %156 = vperm.xlu0 %155, %v50
  %v157 = vpop.permute.xlu0 %156
  %160 = vset.pattern.permute.xlu0 0
  %161 = vperm.xlu0 %160, %v51
  %v162 = vpop.permute.xlu0 %161
  %165 = vset.pattern.permute.xlu0 0
  %166 = vperm.xlu0 %165, %v52
  %v167 = vpop.permute.xlu0 %166
  %170 = vset.pattern.permute.xlu0 0
  %171 = vperm.xlu0 %170, %v53
  %v172 = vpop.permute.xlu0 %171
  %175 = vset.pattern.permute.xlu0 0
  %176 = vperm.xlu0 %175, %v54
  %v177 = vpop.permute.xlu0 %176
  %180 = vset.pattern.permute.xlu0 0
  %181 = vperm.xlu0 %180, %v55
  %v182 = vpop.permute.xlu0 %181
  %185 = vset.pattern.permute.xlu0 0
  %186 = vperm.xlu0 %185, %v56
  %v187 = vpop.permute.xlu0 %186
  %190 = vset.pattern.permute.xlu0 0
  %191 = vperm.xlu0 %190, %v57
  %v192 = vpop.permute.xlu0 %191
  %v194 = vperm.slane %v98, 0
  %v195 = vperm.slane %v99, 0
  %v196 = vperm.slane %v100, 0
  %v197 = vperm.slane %v101, 0
  %v198 = vperm.slane %v102, 0
  %v199 = vperm.slane %v103, 0
  %v200 = vperm.slane %v104, 0
  %v201 = vperm.slane %v105, 0
  %v202 = vperm.slane %v106, 0
  %v203 = vperm.slane %v107, 0
  %v204 = vperm.slane %v108, 0
  %v205 = vperm.slane %v109, 0
  %v206 = vperm.slane %v110, 0
  %v207 = vperm.slane %v111, 0
  %v208 = vperm.slane %v112, 0
  %v209 = vperm.slane %v113, 0
  %v210 = vmul.f32 %v117, %v194
  %v211 = vmul.f32 %v122, %v195
  %v212 = vmul.f32 %v127, %v196
  %v213 = vmul.f32 %v132, %v197
  %v214 = vmul.f32 %v137, %v198
  %v215 = vmul.f32 %v142, %v199
  %v216 = vmul.f32 %v147, %v200
  %v217 = vmul.f32 %v152, %v201
  %v218 = vmul.f32 %v157, %v202
  %v219 = vmul.f32 %v162, %v203
  %v220 = vmul.f32 %v167, %v204
  %v221 = vmul.f32 %v172, %v205
  %v222 = vmul.f32 %v177, %v206
  %v223 = vmul.f32 %v182, %v207
  %v224 = vmul.f32 %v187, %v208
  %v225 = vmul.f32 %v192, %v209
  %226 = vset.pattern.permute.xlu0 1
  %227 = vperm.xlu0 %226, %v42
  %v228 = vpop.permute.xlu0 %227
  %230 = vset.pattern.permute.xlu0 1
  %231 = vperm.xlu0 %230, %v43
  %v232 = vpop.permute.xlu0 %231
  %234 = vset.pattern.permute.xlu0 1
  %235 = vperm.xlu0 %234, %v44
  %v236 = vpop.permute.xlu0 %235
  %238 = vset.pattern.permute.xlu0 1
  %239 = vperm.xlu0 %238, %v45
  %v240 = vpop.permute.xlu0 %239
  %242 = vset.pattern.permute.xlu0 1
  %243 = vperm.xlu0 %242, %v46
  %v244 = vpop.permute.xlu0 %243
  %246 = vset.pattern.permute.xlu0 1
  %247 = vperm.xlu0 %246, %v47
  %v248 = vpop.permute.xlu0 %247
  %250 = vset.pattern.permute.xlu0 1
  %251 = vperm.xlu0 %250, %v48
  %v252 = vpop.permute.xlu0 %251
  %254 = vset.pattern.permute.xlu0 1
  %255 = vperm.xlu0 %254, %v49
  %v256 = vpop.permute.xlu0 %255
  %258 = vset.pattern.permute.xlu0 1
  %259 = vperm.xlu0 %258, %v50
  %v260 = vpop.permute.xlu0 %259
  %262 = vset.pattern.permute.xlu0 1
  %263 = vperm.xlu0 %262, %v51
  %v264 = vpop.permute.xlu0 %263
  %266 = vset.pattern.permute.xlu0 1
  %267 = vperm.xlu0 %266, %v52
  %v268 = vpop.permute.xlu0 %267
  %270 = vset.pattern.permute.xlu0 1
  %271 = vperm.xlu0 %270, %v53
  %v272 = vpop.permute.xlu0 %271
  %274 = vset.pattern.permute.xlu0 1
  %275 = vperm.xlu0 %274, %v54
  %v276 = vpop.permute.xlu0 %275
  %278 = vset.pattern.permute.xlu0 1
  %279 = vperm.xlu0 %278, %v55
  %v280 = vpop.permute.xlu0 %279
  %282 = vset.pattern.permute.xlu0 1
  %283 = vperm.xlu0 %282, %v56
  %v284 = vpop.permute.xlu0 %283
  %286 = vset.pattern.permute.xlu0 1
  %287 = vperm.xlu0 %286, %v57
  %v288 = vpop.permute.xlu0 %287
  %v290 = vperm.slane %v98, 1
  %v291 = vperm.slane %v99, 1
  %v292 = vperm.slane %v100, 1
  %v293 = vperm.slane %v101, 1
  %v294 = vperm.slane %v102, 1
  %v295 = vperm.slane %v103, 1
  %v296 = vperm.slane %v104, 1
  %v297 = vperm.slane %v105, 1
  %v298 = vperm.slane %v106, 1
  %v299 = vperm.slane %v107, 1
  %v300 = vperm.slane %v108, 1
  %v301 = vperm.slane %v109, 1
  %v302 = vperm.slane %v110, 1
  %v303 = vperm.slane %v111, 1
  %v304 = vperm.slane %v112, 1
  %v305 = vperm.slane %v113, 1
  %v306 = vmul.f32 %v228, %v290
  %v307 = vmul.f32 %v232, %v291
  %v308 = vmul.f32 %v236, %v292
  %v309 = vmul.f32 %v240, %v293
  %v310 = vmul.f32 %v244, %v294
  %v311 = vmul.f32 %v248, %v295
  %v312 = vmul.f32 %v252, %v296
  %v313 = vmul.f32 %v256, %v297
  %v314 = vmul.f32 %v260, %v298
  %v315 = vmul.f32 %v264, %v299
  %v316 = vmul.f32 %v268, %v300
  %v317 = vmul.f32 %v272, %v301
  %v318 = vmul.f32 %v276, %v302
  %v319 = vmul.f32 %v280, %v303
  %v320 = vmul.f32 %v284, %v304
  %v321 = vmul.f32 %v288, %v305
  %v322 = vadd.f32 %v210, %v306
  %v323 = vadd.f32 %v211, %v307
  %v324 = vadd.f32 %v212, %v308
  %v325 = vadd.f32 %v213, %v309
  %v326 = vadd.f32 %v214, %v310
  %v327 = vadd.f32 %v215, %v311
  %v328 = vadd.f32 %v216, %v312
  %v329 = vadd.f32 %v217, %v313
  %v330 = vadd.f32 %v218, %v314
  %v331 = vadd.f32 %v219, %v315
  %v332 = vadd.f32 %v220, %v316
  %v333 = vadd.f32 %v221, %v317
  %v334 = vadd.f32 %v222, %v318
  %v335 = vadd.f32 %v223, %v319
  %v336 = vadd.f32 %v224, %v320
  %v337 = vadd.f32 %v225, %v321
  %338 = vset.pattern.permute.xlu0 2
  %339 = vperm.xlu0 %338, %v42
  %v340 = vpop.permute.xlu0 %339
  %342 = vset.pattern.permute.xlu0 2
  %343 = vperm.xlu0 %342, %v43
  %v344 = vpop.permute.xlu0 %343
  %346 = vset.pattern.permute.xlu0 2
  %347 = vperm.xlu0 %346, %v44
  %v348 = vpop.permute.xlu0 %347
  %350 = vset.pattern.permute.xlu0 2
  %351 = vperm.xlu0 %350, %v45
  %v352 = vpop.permute.xlu0 %351
  %354 = vset.pattern.permute.xlu0 2
  %355 = vperm.xlu0 %354, %v46
  %v356 = vpop.permute.xlu0 %355
  %358 = vset.pattern.permute.xlu0 2
  %359 = vperm.xlu0 %358, %v47
  %v360 = vpop.permute.xlu0 %359
  %362 = vset.pattern.permute.xlu0 2
  %363 = vperm.xlu0 %362, %v48
  %v364 = vpop.permute.xlu0 %363
  %366 = vset.pattern.permute.xlu0 2
  %367 = vperm.xlu0 %366, %v49
  %v368 = vpop.permute.xlu0 %367
  %370 = vset.pattern.permute.xlu0 2
  %371 = vperm.xlu0 %370, %v50
  %v372 = vpop.permute.xlu0 %371
  %374 = vset.pattern.permute.xlu0 2
  %375 = vperm.xlu0 %374, %v51
  %v376 = vpop.permute.xlu0 %375
  %378 = vset.pattern.permute.xlu0 2
  %379 = vperm.xlu0 %378, %v52
  %v380 = vpop.permute.xlu0 %379
  %382 = vset.pattern.permute.xlu0 2
  %383 = vperm.xlu0 %382, %v53
  %v384 = vpop.permute.xlu0 %383
  %386 = vset.pattern.permute.xlu0 2
  %387 = vperm.xlu0 %386, %v54
  %v388 = vpop.permute.xlu0 %387
  %390 = vset.pattern.permute.xlu0 2
  %391 = vperm.xlu0 %390, %v55
  %v392 = vpop.permute.xlu0 %391
  %394 = vset.pattern.permute.xlu0 2
  %395 = vperm.xlu0 %394, %v56
  %v396 = vpop.permute.xlu0 %395
  %398 = vset.pattern.permute.xlu0 2
  %399 = vperm.xlu0 %398, %v57
  %v400 = vpop.permute.xlu0 %399
  %v402 = vperm.slane %v98, 2
  %v403 = vperm.slane %v99, 2
  %v404 = vperm.slane %v100, 2
  %v405 = vperm.slane %v101, 2
  %v406 = vperm.slane %v102, 2
  %v407 = vperm.slane %v103, 2
  %v408 = vperm.slane %v104, 2
  %v409 = vperm.slane %v105, 2
  %v410 = vperm.slane %v106, 2
  %v411 = vperm.slane %v107, 2
  %v412 = vperm.slane %v108, 2
  %v413 = vperm.slane %v109, 2
  %v414 = vperm.slane %v110, 2
  %v415 = vperm.slane %v111, 2
  %v416 = vperm.slane %v112, 2
  %v417 = vperm.slane %v113, 2
  %v418 = vmul.f32 %v340, %v402
  %v419 = vmul.f32 %v344, %v403
  %v420 = vmul.f32 %v348, %v404
  %v421 = vmul.f32 %v352, %v405
  %v422 = vmul.f32 %v356, %v406
  %v423 = vmul.f32 %v360, %v407
  %v424 = vmul.f32 %v364, %v408
  %v425 = vmul.f32 %v368, %v409
  %v426 = vmul.f32 %v372, %v410
  %v427 = vmul.f32 %v376, %v411
  %v428 = vmul.f32 %v380, %v412
  %v429 = vmul.f32 %v384, %v413
  %v430 = vmul.f32 %v388, %v414
  %v431 = vmul.f32 %v392, %v415
  %v432 = vmul.f32 %v396, %v416
  %v433 = vmul.f32 %v400, %v417
  %v434 = vadd.f32 %v322, %v418
  %v435 = vadd.f32 %v323, %v419
  %v436 = vadd.f32 %v324, %v420
  %v437 = vadd.f32 %v325, %v421
  %v438 = vadd.f32 %v326, %v422
  %v439 = vadd.f32 %v327, %v423
  %v440 = vadd.f32 %v328, %v424
  %v441 = vadd.f32 %v329, %v425
  %v442 = vadd.f32 %v330, %v426
  %v443 = vadd.f32 %v331, %v427
  %v444 = vadd.f32 %v332, %v428
  %v445 = vadd.f32 %v333, %v429
  %v446 = vadd.f32 %v334, %v430
  %v447 = vadd.f32 %v335, %v431
  %v448 = vadd.f32 %v336, %v432
  %v449 = vadd.f32 %v337, %v433
  %450 = vset.pattern.permute.xlu0 3
  %451 = vperm.xlu0 %450, %v42
  %v452 = vpop.permute.xlu0 %451
  %454 = vset.pattern.permute.xlu0 3
  %455 = vperm.xlu0 %454, %v43
  %v456 = vpop.permute.xlu0 %455
  %458 = vset.pattern.permute.xlu0 3
  %459 = vperm.xlu0 %458, %v44
  %v460 = vpop.permute.xlu0 %459
  %462 = vset.pattern.permute.xlu0 3
  %463 = vperm.xlu0 %462, %v45
  %v464 = vpop.permute.xlu0 %463
  %466 = vset.pattern.permute.xlu0 3
  %467 = vperm.xlu0 %466, %v46
  %v468 = vpop.permute.xlu0 %467
  %470 = vset.pattern.permute.xlu0 3
  %471 = vperm.xlu0 %470, %v47
  %v472 = vpop.permute.xlu0 %471
  %474 = vset.pattern.permute.xlu0 3
  %475 = vperm.xlu0 %474, %v48
  %v476 = vpop.permute.xlu0 %475
  %478 = vset.pattern.permute.xlu0 3
  %479 = vperm.xlu0 %478, %v49
  %v480 = vpop.permute.xlu0 %479
  %482 = vset.pattern.permute.xlu0 3
  %483 = vperm.xlu0 %482, %v50
  %v484 = vpop.permute.xlu0 %483
  %486 = vset.pattern.permute.xlu0 3
  %487 = vperm.xlu0 %486, %v51
  %v488 = vpop.permute.xlu0 %487
  %490 = vset.pattern.permute.xlu0 3
  %491 = vperm.xlu0 %490, %v52
  %v492 = vpop.permute.xlu0 %491
  %494 = vset.pattern.permute.xlu0 3
  %495 = vperm.xlu0 %494, %v53
  %v496 = vpop.permute.xlu0 %495
  %498 = vset.pattern.permute.xlu0 3
  %499 = vperm.xlu0 %498, %v54
  %v500 = vpop.permute.xlu0 %499
  %502 = vset.pattern.permute.xlu0 3
  %503 = vperm.xlu0 %502, %v55
  %v504 = vpop.permute.xlu0 %503
  %506 = vset.pattern.permute.xlu0 3
  %507 = vperm.xlu0 %506, %v56
  %v508 = vpop.permute.xlu0 %507
  %510 = vset.pattern.permute.xlu0 3
  %511 = vperm.xlu0 %510, %v57
  %v512 = vpop.permute.xlu0 %511
  %v514 = vperm.slane %v98, 3
  %v515 = vperm.slane %v99, 3
  %v516 = vperm.slane %v100, 3
  %v517 = vperm.slane %v101, 3
  %v518 = vperm.slane %v102, 3
  %v519 = vperm.slane %v103, 3
  %v520 = vperm.slane %v104, 3
  %v521 = vperm.slane %v105, 3
  %v522 = vperm.slane %v106, 3
  %v523 = vperm.slane %v107, 3
  %v524 = vperm.slane %v108, 3
  %v525 = vperm.slane %v109, 3
  %v526 = vperm.slane %v110, 3
  %v527 = vperm.slane %v111, 3
  %v528 = vperm.slane %v112, 3
  %v529 = vperm.slane %v113, 3
  %v530 = vmul.f32 %v452, %v514
  %v531 = vmul.f32 %v456, %v515
  %v532 = vmul.f32 %v460, %v516
  %v533 = vmul.f32 %v464, %v517
  %v534 = vmul.f32 %v468, %v518
  %v535 = vmul.f32 %v472, %v519
  %v536 = vmul.f32 %v476, %v520
  %v537 = vmul.f32 %v480, %v521
  %v538 = vmul.f32 %v484, %v522
  %v539 = vmul.f32 %v488, %v523
  %v540 = vmul.f32 %v492, %v524
  %v541 = vmul.f32 %v496, %v525
  %v542 = vmul.f32 %v500, %v526
  %v543 = vmul.f32 %v504, %v527
  %v544 = vmul.f32 %v508, %v528
  %v545 = vmul.f32 %v512, %v529
  %v546 = vadd.f32 %v434, %v530
  %v547 = vadd.f32 %v435, %v531
  %v548 = vadd.f32 %v436, %v532
  %v549 = vadd.f32 %v437, %v533
  %v550 = vadd.f32 %v438, %v534
  %v551 = vadd.f32 %v439, %v535
  %v552 = vadd.f32 %v440, %v536
  %v553 = vadd.f32 %v441, %v537
  %v554 = vadd.f32 %v442, %v538
  %v555 = vadd.f32 %v443, %v539
  %v556 = vadd.f32 %v444, %v540
  %v557 = vadd.f32 %v445, %v541
  %v558 = vadd.f32 %v446, %v542
  %v559 = vadd.f32 %v447, %v543
  %v560 = vadd.f32 %v448, %v544
  %v561 = vadd.f32 %v449, %v545
  %562 = vset.pattern.permute.xlu0 4
  %563 = vperm.xlu0 %562, %v42
  %v564 = vpop.permute.xlu0 %563
  %566 = vset.pattern.permute.xlu0 4
  %567 = vperm.xlu0 %566, %v43
  %v568 = vpop.permute.xlu0 %567
  %570 = vset.pattern.permute.xlu0 4
  %571 = vperm.xlu0 %570, %v44
  %v572 = vpop.permute.xlu0 %571
  %574 = vset.pattern.permute.xlu0 4
  %575 = vperm.xlu0 %574, %v45
  %v576 = vpop.permute.xlu0 %575
  %578 = vset.pattern.permute.xlu0 4
  %579 = vperm.xlu0 %578, %v46
  %v580 = vpop.permute.xlu0 %579
  %582 = vset.pattern.permute.xlu0 4
  %583 = vperm.xlu0 %582, %v47
  %v584 = vpop.permute.xlu0 %583
  %586 = vset.pattern.permute.xlu0 4
  %587 = vperm.xlu0 %586, %v48
  %v588 = vpop.permute.xlu0 %587
  %590 = vset.pattern.permute.xlu0 4
  %591 = vperm.xlu0 %590, %v49
  %v592 = vpop.permute.xlu0 %591
  %594 = vset.pattern.permute.xlu0 4
  %595 = vperm.xlu0 %594, %v50
  %v596 = vpop.permute.xlu0 %595
  %598 = vset.pattern.permute.xlu0 4
  %599 = vperm.xlu0 %598, %v51
  %v600 = vpop.permute.xlu0 %599
  %602 = vset.pattern.permute.xlu0 4
  %603 = vperm.xlu0 %602, %v52
  %v604 = vpop.permute.xlu0 %603
  %606 = vset.pattern.permute.xlu0 4
  %607 = vperm.xlu0 %606, %v53
  %v608 = vpop.permute.xlu0 %607
  %610 = vset.pattern.permute.xlu0 4
  %611 = vperm.xlu0 %610, %v54
  %v612 = vpop.permute.xlu0 %611
  %614 = vset.pattern.permute.xlu0 4
  %615 = vperm.xlu0 %614, %v55
  %v616 = vpop.permute.xlu0 %615
  %618 = vset.pattern.permute.xlu0 4
  %619 = vperm.xlu0 %618, %v56
  %v620 = vpop.permute.xlu0 %619
  %622 = vset.pattern.permute.xlu0 4
  %623 = vperm.xlu0 %622, %v57
  %v624 = vpop.permute.xlu0 %623
  %v626 = vperm.slane %v98, 4
  %v627 = vperm.slane %v99, 4
  %v628 = vperm.slane %v100, 4
  %v629 = vperm.slane %v101, 4
  %v630 = vperm.slane %v102, 4
  %v631 = vperm.slane %v103, 4
  %v632 = vperm.slane %v104, 4
  %v633 = vperm.slane %v105, 4
  %v634 = vperm.slane %v106, 4
  %v635 = vperm.slane %v107, 4
  %v636 = vperm.slane %v108, 4
  %v637 = vperm.slane %v109, 4
  %v638 = vperm.slane %v110, 4
  %v639 = vperm.slane %v111, 4
  %v640 = vperm.slane %v112, 4
  %v641 = vperm.slane %v113, 4
  %v642 = vmul.f32 %v564, %v626
  %v643 = vmul.f32 %v568, %v627
  %v644 = vmul.f32 %v572, %v628
  %v645 = vmul.f32 %v576, %v629
  %v646 = vmul.f32 %v580, %v630
  %v647 = vmul.f32 %v584, %v631
  %v648 = vmul.f32 %v588, %v632
  %v649 = vmul.f32 %v592, %v633
  %v650 = vmul.f32 %v596, %v634
  %v651 = vmul.f32 %v600, %v635
  %v652 = vmul.f32 %v604, %v636
  %v653 = vmul.f32 %v608, %v637
  %v654 = vmul.f32 %v612, %v638
  %v655 = vmul.f32 %v616, %v639
  %v656 = vmul.f32 %v620, %v640
  %v657 = vmul.f32 %v624, %v641
  %v658 = vadd.f32 %v546, %v642
  %v659 = vadd.f32 %v547, %v643
  %v660 = vadd.f32 %v548, %v644
  %v661 = vadd.f32 %v549, %v645
  %v662 = vadd.f32 %v550, %v646
  %v663 = vadd.f32 %v551, %v647
  %v664 = vadd.f32 %v552, %v648
  %v665 = vadd.f32 %v553, %v649
  %v666 = vadd.f32 %v554, %v650
  %v667 = vadd.f32 %v555, %v651
  %v668 = vadd.f32 %v556, %v652
  %v669 = vadd.f32 %v557, %v653
  %v670 = vadd.f32 %v558, %v654
  %v671 = vadd.f32 %v559, %v655
  %v672 = vadd.f32 %v560, %v656
  %v673 = vadd.f32 %v561, %v657
  %674 = vset.pattern.permute.xlu0 5
  %675 = vperm.xlu0 %674, %v42
  %v676 = vpop.permute.xlu0 %675
  %678 = vset.pattern.permute.xlu0 5
  %679 = vperm.xlu0 %678, %v43
  %v680 = vpop.permute.xlu0 %679
  %682 = vset.pattern.permute.xlu0 5
  %683 = vperm.xlu0 %682, %v44
  %v684 = vpop.permute.xlu0 %683
  %686 = vset.pattern.permute.xlu0 5
  %687 = vperm.xlu0 %686, %v45
  %v688 = vpop.permute.xlu0 %687
  %690 = vset.pattern.permute.xlu0 5
  %691 = vperm.xlu0 %690, %v46
  %v692 = vpop.permute.xlu0 %691
  %694 = vset.pattern.permute.xlu0 5
  %695 = vperm.xlu0 %694, %v47
  %v696 = vpop.permute.xlu0 %695
  %698 = vset.pattern.permute.xlu0 5
  %699 = vperm.xlu0 %698, %v48
  %v700 = vpop.permute.xlu0 %699
  %702 = vset.pattern.permute.xlu0 5
  %703 = vperm.xlu0 %702, %v49
  %v704 = vpop.permute.xlu0 %703
  %706 = vset.pattern.permute.xlu0 5
  %707 = vperm.xlu0 %706, %v50
  %v708 = vpop.permute.xlu0 %707
  %710 = vset.pattern.permute.xlu0 5
  %711 = vperm.xlu0 %710, %v51
  %v712 = vpop.permute.xlu0 %711
  %714 = vset.pattern.permute.xlu0 5
  %715 = vperm.xlu0 %714, %v52
  %v716 = vpop.permute.xlu0 %715
  %718 = vset.pattern.permute.xlu0 5
  %719 = vperm.xlu0 %718, %v53
  %v720 = vpop.permute.xlu0 %719
  %722 = vset.pattern.permute.xlu0 5
  %723 = vperm.xlu0 %722, %v54
  %v724 = vpop.permute.xlu0 %723
  %726 = vset.pattern.permute.xlu0 5
  %727 = vperm.xlu0 %726, %v55
  %v728 = vpop.permute.xlu0 %727
  %730 = vset.pattern.permute.xlu0 5
  %731 = vperm.xlu0 %730, %v56
  %v732 = vpop.permute.xlu0 %731
  %734 = vset.pattern.permute.xlu0 5
  %735 = vperm.xlu0 %734, %v57
  %v736 = vpop.permute.xlu0 %735
  %v738 = vperm.slane %v98, 5
  %v739 = vperm.slane %v99, 5
  %v740 = vperm.slane %v100, 5
  %v741 = vperm.slane %v101, 5
  %v742 = vperm.slane %v102, 5
  %v743 = vperm.slane %v103, 5
  %v744 = vperm.slane %v104, 5
  %v745 = vperm.slane %v105, 5
  %v746 = vperm.slane %v106, 5
  %v747 = vperm.slane %v107, 5
  %v748 = vperm.slane %v108, 5
  %v749 = vperm.slane %v109, 5
  %v750 = vperm.slane %v110, 5
  %v751 = vperm.slane %v111, 5
  %v752 = vperm.slane %v112, 5
  %v753 = vperm.slane %v113, 5
  %v754 = vmul.f32 %v676, %v738
  %v755 = vmul.f32 %v680, %v739
  %v756 = vmul.f32 %v684, %v740
  %v757 = vmul.f32 %v688, %v741
  %v758 = vmul.f32 %v692, %v742
  %v759 = vmul.f32 %v696, %v743
  %v760 = vmul.f32 %v700, %v744
  %v761 = vmul.f32 %v704, %v745
  %v762 = vmul.f32 %v708, %v746
  %v763 = vmul.f32 %v712, %v747
  %v764 = vmul.f32 %v716, %v748
  %v765 = vmul.f32 %v720, %v749
  %v766 = vmul.f32 %v724, %v750
  %v767 = vmul.f32 %v728, %v751
  %v768 = vmul.f32 %v732, %v752
  %v769 = vmul.f32 %v736, %v753
  %v770 = vadd.f32 %v658, %v754
  %v771 = vadd.f32 %v659, %v755
  %v772 = vadd.f32 %v660, %v756
  %v773 = vadd.f32 %v661, %v757
  %v774 = vadd.f32 %v662, %v758
  %v775 = vadd.f32 %v663, %v759
  %v776 = vadd.f32 %v664, %v760
  %v777 = vadd.f32 %v665, %v761
  %v778 = vadd.f32 %v666, %v762
  %v779 = vadd.f32 %v667, %v763
  %v780 = vadd.f32 %v668, %v764
  %v781 = vadd.f32 %v669, %v765
  %v782 = vadd.f32 %v670, %v766
  %v783 = vadd.f32 %v671, %v767
  %v784 = vadd.f32 %v672, %v768
  %v785 = vadd.f32 %v673, %v769
  %786 = vset.pattern.permute.xlu0 6
  %787 = vperm.xlu0 %786, %v42
  %v788 = vpop.permute.xlu0 %787
  %790 = vset.pattern.permute.xlu0 6
  %791 = vperm.xlu0 %790, %v43
  %v792 = vpop.permute.xlu0 %791
  %794 = vset.pattern.permute.xlu0 6
  %795 = vperm.xlu0 %794, %v44
  %v796 = vpop.permute.xlu0 %795
  %798 = vset.pattern.permute.xlu0 6
  %799 = vperm.xlu0 %798, %v45
  %v800 = vpop.permute.xlu0 %799
  %802 = vset.pattern.permute.xlu0 6
  %803 = vperm.xlu0 %802, %v46
  %v804 = vpop.permute.xlu0 %803
  %806 = vset.pattern.permute.xlu0 6
  %807 = vperm.xlu0 %806, %v47
  %v808 = vpop.permute.xlu0 %807
  %810 = vset.pattern.permute.xlu0 6
  %811 = vperm.xlu0 %810, %v48
  %v812 = vpop.permute.xlu0 %811
  %814 = vset.pattern.permute.xlu0 6
  %815 = vperm.xlu0 %814, %v49
  %v816 = vpop.permute.xlu0 %815
  %818 = vset.pattern.permute.xlu0 6
  %819 = vperm.xlu0 %818, %v50
  %v820 = vpop.permute.xlu0 %819
  %822 = vset.pattern.permute.xlu0 6
  %823 = vperm.xlu0 %822, %v51
  %v824 = vpop.permute.xlu0 %823
  %826 = vset.pattern.permute.xlu0 6
  %827 = vperm.xlu0 %826, %v52
  %v828 = vpop.permute.xlu0 %827
  %830 = vset.pattern.permute.xlu0 6
  %831 = vperm.xlu0 %830, %v53
  %v832 = vpop.permute.xlu0 %831
  %834 = vset.pattern.permute.xlu0 6
  %835 = vperm.xlu0 %834, %v54
  %v836 = vpop.permute.xlu0 %835
  %838 = vset.pattern.permute.xlu0 6
  %839 = vperm.xlu0 %838, %v55
  %v840 = vpop.permute.xlu0 %839
  %842 = vset.pattern.permute.xlu0 6
  %843 = vperm.xlu0 %842, %v56
  %v844 = vpop.permute.xlu0 %843
  %846 = vset.pattern.permute.xlu0 6
  %847 = vperm.xlu0 %846, %v57
  %v848 = vpop.permute.xlu0 %847
  %v850 = vperm.slane %v98, 6
  %v851 = vperm.slane %v99, 6
  %v852 = vperm.slane %v100, 6
  %v853 = vperm.slane %v101, 6
  %v854 = vperm.slane %v102, 6
  %v855 = vperm.slane %v103, 6
  %v856 = vperm.slane %v104, 6
  %v857 = vperm.slane %v105, 6
  %v858 = vperm.slane %v106, 6
  %v859 = vperm.slane %v107, 6
  %v860 = vperm.slane %v108, 6
  %v861 = vperm.slane %v109, 6
  %v862 = vperm.slane %v110, 6
  %v863 = vperm.slane %v111, 6
  %v864 = vperm.slane %v112, 6
  %v865 = vperm.slane %v113, 6
  %v866 = vmul.f32 %v788, %v850
  %v867 = vmul.f32 %v792, %v851
  %v868 = vmul.f32 %v796, %v852
  %v869 = vmul.f32 %v800, %v853
  %v870 = vmul.f32 %v804, %v854
  %v871 = vmul.f32 %v808, %v855
  %v872 = vmul.f32 %v812, %v856
  %v873 = vmul.f32 %v816, %v857
  %v874 = vmul.f32 %v820, %v858
  %v875 = vmul.f32 %v824, %v859
  %v876 = vmul.f32 %v828, %v860
  %v877 = vmul.f32 %v832, %v861
  %v878 = vmul.f32 %v836, %v862
  %v879 = vmul.f32 %v840, %v863
  %v880 = vmul.f32 %v844, %v864
  %v881 = vmul.f32 %v848, %v865
  %v882 = vadd.f32 %v770, %v866
  %v883 = vadd.f32 %v771, %v867
  %v884 = vadd.f32 %v772, %v868
  %v885 = vadd.f32 %v773, %v869
  %v886 = vadd.f32 %v774, %v870
  %v887 = vadd.f32 %v775, %v871
  %v888 = vadd.f32 %v776, %v872
  %v889 = vadd.f32 %v777, %v873
  %v890 = vadd.f32 %v778, %v874
  %v891 = vadd.f32 %v779, %v875
  %v892 = vadd.f32 %v780, %v876
  %v893 = vadd.f32 %v781, %v877
  %v894 = vadd.f32 %v782, %v878
  %v895 = vadd.f32 %v783, %v879
  %v896 = vadd.f32 %v784, %v880
  %v897 = vadd.f32 %v785, %v881
  %898 = vset.pattern.permute.xlu0 7
  %899 = vperm.xlu0 %898, %v42
  %v900 = vpop.permute.xlu0 %899
  %902 = vset.pattern.permute.xlu0 7
  %903 = vperm.xlu0 %902, %v43
  %v904 = vpop.permute.xlu0 %903
  %906 = vset.pattern.permute.xlu0 7
  %907 = vperm.xlu0 %906, %v44
  %v908 = vpop.permute.xlu0 %907
  %910 = vset.pattern.permute.xlu0 7
  %911 = vperm.xlu0 %910, %v45
  %v912 = vpop.permute.xlu0 %911
  %914 = vset.pattern.permute.xlu0 7
  %915 = vperm.xlu0 %914, %v46
  %v916 = vpop.permute.xlu0 %915
  %918 = vset.pattern.permute.xlu0 7
  %919 = vperm.xlu0 %918, %v47
  %v920 = vpop.permute.xlu0 %919
  %922 = vset.pattern.permute.xlu0 7
  %923 = vperm.xlu0 %922, %v48
  %v924 = vpop.permute.xlu0 %923
  %926 = vset.pattern.permute.xlu0 7
  %927 = vperm.xlu0 %926, %v49
  %v928 = vpop.permute.xlu0 %927
  %930 = vset.pattern.permute.xlu0 7
  %931 = vperm.xlu0 %930, %v50
  %v932 = vpop.permute.xlu0 %931
  %934 = vset.pattern.permute.xlu0 7
  %935 = vperm.xlu0 %934, %v51
  %v936 = vpop.permute.xlu0 %935
  %938 = vset.pattern.permute.xlu0 7
  %939 = vperm.xlu0 %938, %v52
  %v940 = vpop.permute.xlu0 %939
  %942 = vset.pattern.permute.xlu0 7
  %943 = vperm.xlu0 %942, %v53
  %v944 = vpop.permute.xlu0 %943
  %946 = vset.pattern.permute.xlu0 7
  %947 = vperm.xlu0 %946, %v54
  %v948 = vpop.permute.xlu0 %947
  %950 = vset.pattern.permute.xlu0 7
  %951 = vperm.xlu0 %950, %v55
  %v952 = vpop.permute.xlu0 %951
  %954 = vset.pattern.permute.xlu0 7
  %955 = vperm.xlu0 %954, %v56
  %v956 = vpop.permute.xlu0 %955
  %958 = vset.pattern.permute.xlu0 7
  %959 = vperm.xlu0 %958, %v57
  %v960 = vpop.permute.xlu0 %959
  %v962 = vperm.slane %v98, 7
  %v963 = vperm.slane %v99, 7
  %v964 = vperm.slane %v100, 7
  %v965 = vperm.slane %v101, 7
  %v966 = vperm.slane %v102, 7
  %v967 = vperm.slane %v103, 7
  %v968 = vperm.slane %v104, 7
  %v969 = vperm.slane %v105, 7
  %v970 = vperm.slane %v106, 7
  %v971 = vperm.slane %v107, 7
  %v972 = vperm.slane %v108, 7
  %v973 = vperm.slane %v109, 7
  %v974 = vperm.slane %v110, 7
  %v975 = vperm.slane %v111, 7
  %v976 = vperm.slane %v112, 7
  %v977 = vperm.slane %v113, 7
  %v978 = vmul.f32 %v900, %v962
  %v979 = vmul.f32 %v904, %v963
  %v980 = vmul.f32 %v908, %v964
  %v981 = vmul.f32 %v912, %v965
  %v982 = vmul.f32 %v916, %v966
  %v983 = vmul.f32 %v920, %v967
  %v984 = vmul.f32 %v924, %v968
  %v985 = vmul.f32 %v928, %v969
  %v986 = vmul.f32 %v932, %v970
  %v987 = vmul.f32 %v936, %v971
  %v988 = vmul.f32 %v940, %v972
  %v989 = vmul.f32 %v944, %v973
  %v990 = vmul.f32 %v948, %v974
  %v991 = vmul.f32 %v952, %v975
  %v992 = vmul.f32 %v956, %v976
  %v993 = vmul.f32 %v960, %v977
  %v994 = vadd.f32 %v882, %v978
  %v995 = vadd.f32 %v883, %v979
  %v996 = vadd.f32 %v884, %v980
  %v997 = vadd.f32 %v885, %v981
  %v998 = vadd.f32 %v886, %v982
  %v999 = vadd.f32 %v887, %v983
  %v1000 = vadd.f32 %v888, %v984
  %v1001 = vadd.f32 %v889, %v985
  %v1002 = vadd.f32 %v890, %v986
  %v1003 = vadd.f32 %v891, %v987
  %v1004 = vadd.f32 %v892, %v988
  %v1005 = vadd.f32 %v893, %v989
  %v1006 = vadd.f32 %v894, %v990
  %v1007 = vadd.f32 %v895, %v991
  %v1008 = vadd.f32 %v896, %v992
  %v1009 = vadd.f32 %v897, %v993
  %v1010 = vld [vmem:[%s4] sm:$0x3]
  %v1011 = vpack.c.bf16 %v995, %v994
  %v1012 = vpack.c.bf16 %v997, %v996
  %v1013 = vpack.c.bf16 %v999, %v998
  %v1014 = vpack.c.bf16 %v1001, %v1000
  %v1015 = vpack.c.bf16 %v1003, %v1002
  %v1016 = vpack.c.bf16 %v1005, %v1004
  %v1017 = vpack.c.bf16 %v1007, %v1006
  %v1018 = vpack.c.bf16 %v1009, %v1008
  %v1019 = vld [vmem:[%s5] sm:$0x1]
  %v1021 = vperm.slane %v1019, 0
  %vm1023 = vcmask 31744
  %v1025 = vsel %vm1023, %v1011, 0
  %v1028 = vsel %vm1023, %v1012, 0
  %v1031 = vsel %vm1023, %v1013, 0
  %v1034 = vsel %vm1023, %v1014, 0
  %v1037 = vsel %vm1023, %v1015, 0
  %v1040 = vsel %vm1023, %v1016, 0
  %v1043 = vsel %vm1023, %v1017, 0
  %v1046 = vsel %vm1023, %v1018, 0
  %vm1048 = vcmask 1041408
  %v1050 = vsel %vm1048, %v1010, 0
  %1052 = vmatpush.bf16.msra.mxu0 0
  %1053 = vmatpush.bf16.msra.mxu0 0
  %1054 = vmatpush.bf16.msra.mxu0 0
  %1055 = vmatpush.bf16.msra.mxu0 0
  %1056 = vmatpush.bf16.msra.mxu0 0
  %1057 = vmatpush.bf16.msra.mxu0 0
  %1058 = vmatpush.bf16.msra.mxu0 0
  %1059 = vmatpush.bf16.msra.mxu0 %v1050
  %1060 = vmatmul.bf16.gmra.mxu0 %v1025
  %v1061 = vpop.f32.mrf.mxu0
  %v1062 = vadd.f32 %v1021, %v1061
  %v1063 = vpop.f32.mrf.mxu0
  %v1064 = vadd.f32 %v1021, %v1063
  %1065 = vmatmul.bf16.gmra.mxu0 %v1028
  %v1066 = vpop.f32.mrf.mxu0
  %v1067 = vadd.f32 %v1021, %v1066
  %v1068 = vpop.f32.mrf.mxu0
  %v1069 = vadd.f32 %v1021, %v1068
  %1070 = vmatmul.bf16.gmra.mxu0 %v1031
  %v1071 = vpop.f32.mrf.mxu0
  %v1072 = vadd.f32 %v1021, %v1071
  %v1073 = vpop.f32.mrf.mxu0
  %v1074 = vadd.f32 %v1021, %v1073
  %1075 = vmatmul.bf16.gmra.mxu0 %v1034
  %v1076 = vpop.f32.mrf.mxu0
  %v1077 = vadd.f32 %v1021, %v1076
  %v1078 = vpop.f32.mrf.mxu0
  %v1079 = vadd.f32 %v1021, %v1078
  %1080 = vmatmul.bf16.gmra.mxu0 %v1037
  %v1081 = vpop.f32.mrf.mxu0
  %v1082 = vadd.f32 %v1021, %v1081
  %v1083 = vpop.f32.mrf.mxu0
  %v1084 = vadd.f32 %v1021, %v1083
  %1085 = vmatmul.bf16.gmra.mxu0 %v1040
  %v1086 = vpop.f32.mrf.mxu0
  %v1087 = vadd.f32 %v1021, %v1086
  %v1088 = vpop.f32.mrf.mxu0
  %v1089 = vadd.f32 %v1021, %v1088
  %1090 = vmatmul.bf16.gmra.mxu0 %v1043
  %v1091 = vpop.f32.mrf.mxu0
  %v1092 = vadd.f32 %v1021, %v1091
  %v1093 = vpop.f32.mrf.mxu0
  %v1094 = vadd.f32 %v1021, %v1093
  %1095 = vmatmul.bf16.gmra.mxu0 %v1046
  %v1096 = vpop.f32.mrf.mxu0
  %v1097 = vadd.f32 %v1021, %v1096
  %v1098 = vpop.f32.mrf.mxu0
  %v1099 = vadd.f32 %v1021, %v1098
  %1100 = vdwg.mxu0
  %v1101 = vmax.f32 %v1062, 0.0
  %v1102 = vmax.f32 %v1064, 0.0
  %v1103 = vmax.f32 %v1067, 0.0
  %v1104 = vmax.f32 %v1069, 0.0
  %v1105 = vmax.f32 %v1072, 0.0
  %v1106 = vmax.f32 %v1074, 0.0
  %v1107 = vmax.f32 %v1077, 0.0
  %v1108 = vmax.f32 %v1079, 0.0
  %v1109 = vmax.f32 %v1082, 0.0
  %v1110 = vmax.f32 %v1084, 0.0
  %v1111 = vmax.f32 %v1087, 0.0
  %v1112 = vmax.f32 %v1089, 0.0
  %v1113 = vmax.f32 %v1092, 0.0
  %v1114 = vmax.f32 %v1094, 0.0
  %v1115 = vmax.f32 %v1097, 0.0
  %v1116 = vmax.f32 %v1099, 0.0
  %v1117 = vperm.slane %v1101, 0
  %v1118 = vperm.slane %v1102, 0
  %v1119 = vperm.slane %v1103, 0
  %v1120 = vperm.slane %v1104, 0
  %v1121 = vperm.slane %v1105, 0
  %v1122 = vperm.slane %v1106, 0
  %v1123 = vperm.slane %v1107, 0
  %v1124 = vperm.slane %v1108, 0
  %v1125 = vperm.slane %v1109, 0
  %v1126 = vperm.slane %v1110, 0
  %v1127 = vperm.slane %v1111, 0
  %v1128 = vperm.slane %v1112, 0
  %v1129 = vperm.slane %v1113, 0
  %v1130 = vperm.slane %v1114, 0
  %v1131 = vperm.slane %v1115, 0
  %v1132 = vperm.slane %v1116, 0
  %v1133 = vmul.f32 %v117, %v1117
  %v1134 = vmul.f32 %v122, %v1118
  %v1135 = vmul.f32 %v127, %v1119
  %v1136 = vmul.f32 %v132, %v1120
  %v1137 = vmul.f32 %v137, %v1121
  %v1138 = vmul.f32 %v142, %v1122
  %v1139 = vmul.f32 %v147, %v1123
  %v1140 = vmul.f32 %v152, %v1124
  %v1141 = vmul.f32 %v157, %v1125
  %v1142 = vmul.f32 %v162, %v1126
  %v1143 = vmul.f32 %v167, %v1127
  %v1144 = vmul.f32 %v172, %v1128
  %v1145 = vmul.f32 %v177, %v1129
  %v1146 = vmul.f32 %v182, %v1130
  %v1147 = vmul.f32 %v187, %v1131
  %v1148 = vmul.f32 %v192, %v1132
  %v1149 = vperm.slane %v1101, 1
  %v1150 = vperm.slane %v1102, 1
  %v1151 = vperm.slane %v1103, 1
  %v1152 = vperm.slane %v1104, 1
  %v1153 = vperm.slane %v1105, 1
  %v1154 = vperm.slane %v1106, 1
  %v1155 = vperm.slane %v1107, 1
  %v1156 = vperm.slane %v1108, 1
  %v1157 = vperm.slane %v1109, 1
  %v1158 = vperm.slane %v1110, 1
  %v1159 = vperm.slane %v1111, 1
  %v1160 = vperm.slane %v1112, 1
  %v1161 = vperm.slane %v1113, 1
  %v1162 = vperm.slane %v1114, 1
  %v1163 = vperm.slane %v1115, 1
  %v1164 = vperm.slane %v1116, 1
  %v1165 = vmul.f32 %v228, %v1149
  %v1166 = vmul.f32 %v232, %v1150
  %v1167 = vmul.f32 %v236, %v1151
  %v1168 = vmul.f32 %v240, %v1152
  %v1169 = vmul.f32 %v244, %v1153
  %v1170 = vmul.f32 %v248, %v1154
  %v1171 = vmul.f32 %v252, %v1155
  %v1172 = vmul.f32 %v256, %v1156
  %v1173 = vmul.f32 %v260, %v1157
  %v1174 = vmul.f32 %v264, %v1158
  %v1175 = vmul.f32 %v268, %v1159
  %v1176 = vmul.f32 %v272, %v1160
  %v1177 = vmul.f32 %v276, %v1161
  %v1178 = vmul.f32 %v280, %v1162
  %v1179 = vmul.f32 %v284, %v1163
  %v1180 = vmul.f32 %v288, %v1164
  %v1181 = vadd.f32 %v1133, %v1165
  %v1182 = vadd.f32 %v1134, %v1166
  %v1183 = vadd.f32 %v1135, %v1167
  %v1184 = vadd.f32 %v1136, %v1168
  %v1185 = vadd.f32 %v1137, %v1169
  %v1186 = vadd.f32 %v1138, %v1170
  %v1187 = vadd.f32 %v1139, %v1171
  %v1188 = vadd.f32 %v1140, %v1172
  %v1189 = vadd.f32 %v1141, %v1173
  %v1190 = vadd.f32 %v1142, %v1174
  %v1191 = vadd.f32 %v1143, %v1175
  %v1192 = vadd.f32 %v1144, %v1176
  %v1193 = vadd.f32 %v1145, %v1177
  %v1194 = vadd.f32 %v1146, %v1178
  %v1195 = vadd.f32 %v1147, %v1179
  %v1196 = vadd.f32 %v1148, %v1180
  %v1197 = vperm.slane %v1101, 2
  %v1198 = vperm.slane %v1102, 2
  %v1199 = vperm.slane %v1103, 2
  %v1200 = vperm.slane %v1104, 2
  %v1201 = vperm.slane %v1105, 2
  %v1202 = vperm.slane %v1106, 2
  %v1203 = vperm.slane %v1107, 2
  %v1204 = vperm.slane %v1108, 2
  %v1205 = vperm.slane %v1109, 2
  %v1206 = vperm.slane %v1110, 2
  %v1207 = vperm.slane %v1111, 2
  %v1208 = vperm.slane %v1112, 2
  %v1209 = vperm.slane %v1113, 2
  %v1210 = vperm.slane %v1114, 2
  %v1211 = vperm.slane %v1115, 2
  %v1212 = vperm.slane %v1116, 2
  %v1213 = vmul.f32 %v340, %v1197
  %v1214 = vmul.f32 %v344, %v1198
  %v1215 = vmul.f32 %v348, %v1199
  %v1216 = vmul.f32 %v352, %v1200
  %v1217 = vmul.f32 %v356, %v1201
  %v1218 = vmul.f32 %v360, %v1202
  %v1219 = vmul.f32 %v364, %v1203
  %v1220 = vmul.f32 %v368, %v1204
  %v1221 = vmul.f32 %v372, %v1205
  %v1222 = vmul.f32 %v376, %v1206
  %v1223 = vmul.f32 %v380, %v1207
  %v1224 = vmul.f32 %v384, %v1208
  %v1225 = vmul.f32 %v388, %v1209
  %v1226 = vmul.f32 %v392, %v1210
  %v1227 = vmul.f32 %v396, %v1211
  %v1228 = vmul.f32 %v400, %v1212
  %v1229 = vadd.f32 %v1181, %v1213
  %v1230 = vadd.f32 %v1182, %v1214
  %v1231 = vadd.f32 %v1183, %v1215
  %v1232 = vadd.f32 %v1184, %v1216
  %v1233 = vadd.f32 %v1185, %v1217
  %v1234 = vadd.f32 %v1186, %v1218
  %v1235 = vadd.f32 %v1187, %v1219
  %v1236 = vadd.f32 %v1188, %v1220
  %v1237 = vadd.f32 %v1189, %v1221
  %v1238 = vadd.f32 %v1190, %v1222
  %v1239 = vadd.f32 %v1191, %v1223
  %v1240 = vadd.f32 %v1192, %v1224
  %v1241 = vadd.f32 %v1193, %v1225
  %v1242 = vadd.f32 %v1194, %v1226
  %v1243 = vadd.f32 %v1195, %v1227
  %v1244 = vadd.f32 %v1196, %v1228
  %v1245 = vperm.slane %v1101, 3
  %v1246 = vperm.slane %v1102, 3
  %v1247 = vperm.slane %v1103, 3
  %v1248 = vperm.slane %v1104, 3
  %v1249 = vperm.slane %v1105, 3
  %v1250 = vperm.slane %v1106, 3
  %v1251 = vperm.slane %v1107, 3
  %v1252 = vperm.slane %v1108, 3
  %v1253 = vperm.slane %v1109, 3
  %v1254 = vperm.slane %v1110, 3
  %v1255 = vperm.slane %v1111, 3
  %v1256 = vperm.slane %v1112, 3
  %v1257 = vperm.slane %v1113, 3
  %v1258 = vperm.slane %v1114, 3
  %v1259 = vperm.slane %v1115, 3
  %v1260 = vperm.slane %v1116, 3
  %v1261 = vmul.f32 %v452, %v1245
  %v1262 = vmul.f32 %v456, %v1246
  %v1263 = vmul.f32 %v460, %v1247
  %v1264 = vmul.f32 %v464, %v1248
  %v1265 = vmul.f32 %v468, %v1249
  %v1266 = vmul.f32 %v472, %v1250
  %v1267 = vmul.f32 %v476, %v1251
  %v1268 = vmul.f32 %v480, %v1252
  %v1269 = vmul.f32 %v484, %v1253
  %v1270 = vmul.f32 %v488, %v1254
  %v1271 = vmul.f32 %v492, %v1255
  %v1272 = vmul.f32 %v496, %v1256
  %v1273 = vmul.f32 %v500, %v1257
  %v1274 = vmul.f32 %v504, %v1258
  %v1275 = vmul.f32 %v508, %v1259
  %v1276 = vmul.f32 %v512, %v1260
  %v1277 = vadd.f32 %v1229, %v1261
  %v1278 = vadd.f32 %v1230, %v1262
  %v1279 = vadd.f32 %v1231, %v1263
  %v1280 = vadd.f32 %v1232, %v1264
  %v1281 = vadd.f32 %v1233, %v1265
  %v1282 = vadd.f32 %v1234, %v1266
  %v1283 = vadd.f32 %v1235, %v1267
  %v1284 = vadd.f32 %v1236, %v1268
  %v1285 = vadd.f32 %v1237, %v1269
  %v1286 = vadd.f32 %v1238, %v1270
  %v1287 = vadd.f32 %v1239, %v1271
  %v1288 = vadd.f32 %v1240, %v1272
  %v1289 = vadd.f32 %v1241, %v1273
  %v1290 = vadd.f32 %v1242, %v1274
  %v1291 = vadd.f32 %v1243, %v1275
  %v1292 = vadd.f32 %v1244, %v1276
  %v1293 = vperm.slane %v1101, 4
  %v1294 = vperm.slane %v1102, 4
  %v1295 = vperm.slane %v1103, 4
  %v1296 = vperm.slane %v1104, 4
  %v1297 = vperm.slane %v1105, 4
  %v1298 = vperm.slane %v1106, 4
  %v1299 = vperm.slane %v1107, 4
  %v1300 = vperm.slane %v1108, 4
  %v1301 = vperm.slane %v1109, 4
  %v1302 = vperm.slane %v1110, 4
  %v1303 = vperm.slane %v1111, 4
  %v1304 = vperm.slane %v1112, 4
  %v1305 = vperm.slane %v1113, 4
  %v1306 = vperm.slane %v1114, 4
  %v1307 = vperm.slane %v1115, 4
  %v1308 = vperm.slane %v1116, 4
  %v1309 = vmul.f32 %v564, %v1293
  %v1310 = vmul.f32 %v568, %v1294
  %v1311 = vmul.f32 %v572, %v1295
  %v1312 = vmul.f32 %v576, %v1296
  %v1313 = vmul.f32 %v580, %v1297
  %v1314 = vmul.f32 %v584, %v1298
  %v1315 = vmul.f32 %v588, %v1299
  %v1316 = vmul.f32 %v592, %v1300
  %v1317 = vmul.f32 %v596, %v1301
  %v1318 = vmul.f32 %v600, %v1302
  %v1319 = vmul.f32 %v604, %v1303
  %v1320 = vmul.f32 %v608, %v1304
  %v1321 = vmul.f32 %v612, %v1305
  %v1322 = vmul.f32 %v616, %v1306
  %v1323 = vmul.f32 %v620, %v1307
  %v1324 = vmul.f32 %v624, %v1308
  %v1325 = vadd.f32 %v1277, %v1309
  %v1326 = vadd.f32 %v1278, %v1310
  %v1327 = vadd.f32 %v1279, %v1311
  %v1328 = vadd.f32 %v1280, %v1312
  %v1329 = vadd.f32 %v1281, %v1313
  %v1330 = vadd.f32 %v1282, %v1314
  %v1331 = vadd.f32 %v1283, %v1315
  %v1332 = vadd.f32 %v1284, %v1316
  %v1333 = vadd.f32 %v1285, %v1317
  %v1334 = vadd.f32 %v1286, %v1318
  %v1335 = vadd.f32 %v1287, %v1319
  %v1336 = vadd.f32 %v1288, %v1320
  %v1337 = vadd.f32 %v1289, %v1321
  %v1338 = vadd.f32 %v1290, %v1322
  %v1339 = vadd.f32 %v1291, %v1323
  %v1340 = vadd.f32 %v1292, %v1324
  %v1341 = vperm.slane %v1101, 5
  %v1342 = vperm.slane %v1102, 5
  %v1343 = vperm.slane %v1103, 5
  %v1344 = vperm.slane %v1104, 5
  %v1345 = vperm.slane %v1105, 5
  %v1346 = vperm.slane %v1106, 5
  %v1347 = vperm.slane %v1107, 5
  %v1348 = vperm.slane %v1108, 5
  %v1349 = vperm.slane %v1109, 5
  %v1350 = vperm.slane %v1110, 5
  %v1351 = vperm.slane %v1111, 5
  %v1352 = vperm.slane %v1112, 5
  %v1353 = vperm.slane %v1113, 5
  %v1354 = vperm.slane %v1114, 5
  %v1355 = vperm.slane %v1115, 5
  %v1356 = vperm.slane %v1116, 5
  %v1357 = vmul.f32 %v676, %v1341
  %v1358 = vmul.f32 %v680, %v1342
  %v1359 = vmul.f32 %v684, %v1343
  %v1360 = vmul.f32 %v688, %v1344
  %v1361 = vmul.f32 %v692, %v1345
  %v1362 = vmul.f32 %v696, %v1346
  %v1363 = vmul.f32 %v700, %v1347
  %v1364 = vmul.f32 %v704, %v1348
  %v1365 = vmul.f32 %v708, %v1349
  %v1366 = vmul.f32 %v712, %v1350
  %v1367 = vmul.f32 %v716, %v1351
  %v1368 = vmul.f32 %v720, %v1352
  %v1369 = vmul.f32 %v724, %v1353
  %v1370 = vmul.f32 %v728, %v1354
  %v1371 = vmul.f32 %v732, %v1355
  %v1372 = vmul.f32 %v736, %v1356
  %v1373 = vadd.f32 %v1325, %v1357
  %v1374 = vadd.f32 %v1326, %v1358
  %v1375 = vadd.f32 %v1327, %v1359
  %v1376 = vadd.f32 %v1328, %v1360
  %v1377 = vadd.f32 %v1329, %v1361
  %v1378 = vadd.f32 %v1330, %v1362
  %v1379 = vadd.f32 %v1331, %v1363
  %v1380 = vadd.f32 %v1332, %v1364
  %v1381 = vadd.f32 %v1333, %v1365
  %v1382 = vadd.f32 %v1334, %v1366
  %v1383 = vadd.f32 %v1335, %v1367
  %v1384 = vadd.f32 %v1336, %v1368
  %v1385 = vadd.f32 %v1337, %v1369
  %v1386 = vadd.f32 %v1338, %v1370
  %v1387 = vadd.f32 %v1339, %v1371
  %v1388 = vadd.f32 %v1340, %v1372
  %v1389 = vperm.slane %v1101, 6
  %v1390 = vperm.slane %v1102, 6
  %v1391 = vperm.slane %v1103, 6
  %v1392 = vperm.slane %v1104, 6
  %v1393 = vperm.slane %v1105, 6
  %v1394 = vperm.slane %v1106, 6
  %v1395 = vperm.slane %v1107, 6
  %v1396 = vperm.slane %v1108, 6
  %v1397 = vperm.slane %v1109, 6
  %v1398 = vperm.slane %v1110, 6
  %v1399 = vperm.slane %v1111, 6
  %v1400 = vperm.slane %v1112, 6
  %v1401 = vperm.slane %v1113, 6
  %v1402 = vperm.slane %v1114, 6
  %v1403 = vperm.slane %v1115, 6
  %v1404 = vperm.slane %v1116, 6
  %v1405 = vmul.f32 %v788, %v1389
  %v1406 = vmul.f32 %v792, %v1390
  %v1407 = vmul.f32 %v796, %v1391
  %v1408 = vmul.f32 %v800, %v1392
  %v1409 = vmul.f32 %v804, %v1393
  %v1410 = vmul.f32 %v808, %v1394
  %v1411 = vmul.f32 %v812, %v1395
  %v1412 = vmul.f32 %v816, %v1396
  %v1413 = vmul.f32 %v820, %v1397
  %v1414 = vmul.f32 %v824, %v1398
  %v1415 = vmul.f32 %v828, %v1399
  %v1416 = vmul.f32 %v832, %v1400
  %v1417 = vmul.f32 %v836, %v1401
  %v1418 = vmul.f32 %v840, %v1402
  %v1419 = vmul.f32 %v844, %v1403
  %v1420 = vmul.f32 %v848, %v1404
  %v1421 = vadd.f32 %v1373, %v1405
  %v1422 = vadd.f32 %v1374, %v1406
  %v1423 = vadd.f32 %v1375, %v1407
  %v1424 = vadd.f32 %v1376, %v1408
  %v1425 = vadd.f32 %v1377, %v1409
  %v1426 = vadd.f32 %v1378, %v1410
  %v1427 = vadd.f32 %v1379, %v1411
  %v1428 = vadd.f32 %v1380, %v1412
  %v1429 = vadd.f32 %v1381, %v1413
  %v1430 = vadd.f32 %v1382, %v1414
  %v1431 = vadd.f32 %v1383, %v1415
  %v1432 = vadd.f32 %v1384, %v1416
  %v1433 = vadd.f32 %v1385, %v1417
  %v1434 = vadd.f32 %v1386, %v1418
  %v1435 = vadd.f32 %v1387, %v1419
  %v1436 = vadd.f32 %v1388, %v1420
  %v1437 = vperm.slane %v1101, 7
  %v1438 = vperm.slane %v1102, 7
  %v1439 = vperm.slane %v1103, 7
  %v1440 = vperm.slane %v1104, 7
  %v1441 = vperm.slane %v1105, 7
  %v1442 = vperm.slane %v1106, 7
  %v1443 = vperm.slane %v1107, 7
  %v1444 = vperm.slane %v1108, 7
  %v1445 = vperm.slane %v1109, 7
  %v1446 = vperm.slane %v1110, 7
  %v1447 = vperm.slane %v1111, 7
  %v1448 = vperm.slane %v1112, 7
  %v1449 = vperm.slane %v1113, 7
  %v1450 = vperm.slane %v1114, 7
  %v1451 = vperm.slane %v1115, 7
  %v1452 = vperm.slane %v1116, 7
  %v1453 = vmul.f32 %v900, %v1437
  %v1454 = vmul.f32 %v904, %v1438
  %v1455 = vmul.f32 %v908, %v1439
  %v1456 = vmul.f32 %v912, %v1440
  %v1457 = vmul.f32 %v916, %v1441
  %v1458 = vmul.f32 %v920, %v1442
  %v1459 = vmul.f32 %v924, %v1443
  %v1460 = vmul.f32 %v928, %v1444
  %v1461 = vmul.f32 %v932, %v1445
  %v1462 = vmul.f32 %v936, %v1446
  %v1463 = vmul.f32 %v940, %v1447
  %v1464 = vmul.f32 %v944, %v1448
  %v1465 = vmul.f32 %v948, %v1449
  %v1466 = vmul.f32 %v952, %v1450
  %v1467 = vmul.f32 %v956, %v1451
  %v1468 = vmul.f32 %v960, %v1452
  %v1469 = vadd.f32 %v1421, %v1453
  %v1470 = vadd.f32 %v1422, %v1454
  %v1471 = vadd.f32 %v1423, %v1455
  %v1472 = vadd.f32 %v1424, %v1456
  %v1473 = vadd.f32 %v1425, %v1457
  %v1474 = vadd.f32 %v1426, %v1458
  %v1475 = vadd.f32 %v1427, %v1459
  %v1476 = vadd.f32 %v1428, %v1460
  %v1477 = vadd.f32 %v1429, %v1461
  %v1478 = vadd.f32 %v1430, %v1462
  %v1479 = vadd.f32 %v1431, %v1463
  %v1480 = vadd.f32 %v1432, %v1464
  %v1481 = vadd.f32 %v1433, %v1465
  %v1482 = vadd.f32 %v1434, %v1466
  %v1483 = vadd.f32 %v1435, %v1467
  %v1484 = vadd.f32 %v1436, %v1468
  %v1485 = vld [vmem:[%s6] sm:$0xf]
  %v1486 = vpack.c.bf16 %v1470, %v1469
  %v1487 = vpack.c.bf16 %v1472, %v1471
  %v1488 = vpack.c.bf16 %v1474, %v1473
  %v1489 = vpack.c.bf16 %v1476, %v1475
  %v1490 = vpack.c.bf16 %v1478, %v1477
  %v1491 = vpack.c.bf16 %v1480, %v1479
  %v1492 = vpack.c.bf16 %v1482, %v1481
  %v1493 = vpack.c.bf16 %v1484, %v1483
  %v1494 = vld [vmem:[%s7] sm:$0x1]
  %v1496 = vperm.slane %v1494, 0
  %vm1498 = vcmask 64512
  %v1500 = vsel %vm1498, %v1486, 0
  %v1503 = vsel %vm1498, %v1487, 0
  %v1506 = vsel %vm1498, %v1488, 0
  %v1509 = vsel %vm1498, %v1489, 0
  %v1512 = vsel %vm1498, %v1490, 0
  %v1515 = vsel %vm1498, %v1491, 0
  %v1518 = vsel %vm1498, %v1492, 0
  %v1521 = vsel %vm1498, %v1493, 0
  %vm1523 = vcmask 1043456
  %v1525 = vsel %vm1523, %v1485, 0
  %1527 = vmatpush.bf16.msra.mxu0 0
  %1528 = vmatpush.bf16.msra.mxu0 0
  %1529 = vmatpush.bf16.msra.mxu0 0
  %1530 = vmatpush.bf16.msra.mxu0 0
  %1531 = vmatpush.bf16.msra.mxu0 0
  %1532 = vmatpush.bf16.msra.mxu0 0
  %1533 = vmatpush.bf16.msra.mxu0 0
  %1534 = vmatpush.bf16.msra.mxu0 %v1525
  %1535 = vmatmul.bf16.gmra.mxu0 %v1500
  %v1536 = vpop.f32.mrf.mxu0
  %v1537 = vadd.f32 %v1496, %v1536
  %v1538 = vpop.f32.mrf.mxu0
  %v1539 = vadd.f32 %v1496, %v1538
  %1540 = vmatmul.bf16.gmra.mxu0 %v1503
  %v1541 = vpop.f32.mrf.mxu0
  %v1542 = vadd.f32 %v1496, %v1541
  %v1543 = vpop.f32.mrf.mxu0
  %v1544 = vadd.f32 %v1496, %v1543
  %1545 = vmatmul.bf16.gmra.mxu0 %v1506
  %v1546 = vpop.f32.mrf.mxu0
  %v1547 = vadd.f32 %v1496, %v1546
  %v1548 = vpop.f32.mrf.mxu0
  %v1549 = vadd.f32 %v1496, %v1548
  %1550 = vmatmul.bf16.gmra.mxu0 %v1509
  %v1551 = vpop.f32.mrf.mxu0
  %v1552 = vadd.f32 %v1496, %v1551
  %v1553 = vpop.f32.mrf.mxu0
  %v1554 = vadd.f32 %v1496, %v1553
  %1555 = vmatmul.bf16.gmra.mxu0 %v1512
  %v1556 = vpop.f32.mrf.mxu0
  %v1557 = vadd.f32 %v1496, %v1556
  %v1558 = vpop.f32.mrf.mxu0
  %v1559 = vadd.f32 %v1496, %v1558
  %1560 = vmatmul.bf16.gmra.mxu0 %v1515
  %v1561 = vpop.f32.mrf.mxu0
  %v1562 = vadd.f32 %v1496, %v1561
  %v1563 = vpop.f32.mrf.mxu0
  %v1564 = vadd.f32 %v1496, %v1563
  %1565 = vmatmul.bf16.gmra.mxu0 %v1518
  %v1566 = vpop.f32.mrf.mxu0
  %v1567 = vadd.f32 %v1496, %v1566
  %v1568 = vpop.f32.mrf.mxu0
  %v1569 = vadd.f32 %v1496, %v1568
  %1570 = vmatmul.bf16.gmra.mxu0 %v1521
  %v1571 = vpop.f32.mrf.mxu0
  %v1572 = vadd.f32 %v1496, %v1571
  %v1573 = vpop.f32.mrf.mxu0
  %v1574 = vadd.f32 %v1496, %v1573
  %1575 = vdwg.mxu0
  %v1576 = vmax.f32 %v1537, 0.0
  %v1577 = vmax.f32 %v1539, 0.0
  %v1578 = vmax.f32 %v1542, 0.0
  %v1579 = vmax.f32 %v1544, 0.0
  %v1580 = vmax.f32 %v1547, 0.0
  %v1581 = vmax.f32 %v1549, 0.0
  %v1582 = vmax.f32 %v1552, 0.0
  %v1583 = vmax.f32 %v1554, 0.0
  %v1584 = vmax.f32 %v1557, 0.0
  %v1585 = vmax.f32 %v1559, 0.0
  %v1586 = vmax.f32 %v1562, 0.0
  %v1587 = vmax.f32 %v1564, 0.0
  %v1588 = vmax.f32 %v1567, 0.0
  %v1589 = vmax.f32 %v1569, 0.0
  %v1590 = vmax.f32 %v1572, 0.0
  %v1591 = vmax.f32 %v1574, 0.0
  %v1592 = vld [vmem:[%s8] sm:$0xf]
  %v1593 = vld [vmem:[%s8 + $0x4] sm:$0xf]
  %v1594 = vpack.c.bf16 %v1577, %v1576
  %v1595 = vpack.c.bf16 %v1579, %v1578
  %v1596 = vpack.c.bf16 %v1581, %v1580
  %v1597 = vpack.c.bf16 %v1583, %v1582
  %v1598 = vpack.c.bf16 %v1585, %v1584
  %v1599 = vpack.c.bf16 %v1587, %v1586
  %v1600 = vpack.c.bf16 %v1589, %v1588
  %v1601 = vpack.c.bf16 %v1591, %v1590
  %v1602 = vld [vmem:[%s9] sm:$0x1]
  %v1604 = vperm.slane %v1602, 0
  %v1608 = vunpack.c.l.b16 %v1592
  %v1609 = vunpack.c.l.b16 %v1593
  %v1610 = vpack.c.b16 %v1609, %v1608
  %vm1612 = vcmask 130048
  %v1614 = vsel %vm1612, %v1594, 0
  %v1617 = vsel %vm1612, %v1595, 0
  %v1620 = vsel %vm1612, %v1596, 0
  %v1623 = vsel %vm1612, %v1597, 0
  %v1626 = vsel %vm1612, %v1598, 0
  %v1629 = vsel %vm1612, %v1599, 0
  %v1632 = vsel %vm1612, %v1600, 0
  %v1635 = vsel %vm1612, %v1601, 0
  %1637 = vmatpush.bf16.msra.mxu0 0
  %1638 = vmatpush.bf16.msra.mxu0 0
  %1639 = vmatpush.bf16.msra.mxu0 0
  %1640 = vmatpush.bf16.msra.mxu0 0
  %1641 = vmatpush.bf16.msra.mxu0 0
  %1642 = vmatpush.bf16.msra.mxu0 0
  %1643 = vmatpush.bf16.msra.mxu0 0
  %1644 = vmatpush.bf16.msra.mxu0 %v1610
  %1645 = vmatmul.bf16.gmra.mxu0 %v1614
  %v1646 = vpop.f32.mrf.mxu0
  %v1647 = vadd.f32 %v1604, %v1646
  %v1648 = vpop.f32.mrf.mxu0
  %v1649 = vadd.f32 %v1604, %v1648
  %1650 = vmatmul.bf16.gmra.mxu0 %v1617
  %v1651 = vpop.f32.mrf.mxu0
  %v1652 = vadd.f32 %v1604, %v1651
  %v1653 = vpop.f32.mrf.mxu0
  %v1654 = vadd.f32 %v1604, %v1653
  %1655 = vmatmul.bf16.gmra.mxu0 %v1620
  %v1656 = vpop.f32.mrf.mxu0
  %v1657 = vadd.f32 %v1604, %v1656
  %v1658 = vpop.f32.mrf.mxu0
  %v1659 = vadd.f32 %v1604, %v1658
  %1660 = vmatmul.bf16.gmra.mxu0 %v1623
  %v1661 = vpop.f32.mrf.mxu0
  %v1662 = vadd.f32 %v1604, %v1661
  %v1663 = vpop.f32.mrf.mxu0
  %v1664 = vadd.f32 %v1604, %v1663
  %1665 = vmatmul.bf16.gmra.mxu0 %v1626
  %v1666 = vpop.f32.mrf.mxu0
  %v1667 = vadd.f32 %v1604, %v1666
  %v1668 = vpop.f32.mrf.mxu0
  %v1669 = vadd.f32 %v1604, %v1668
  %1670 = vmatmul.bf16.gmra.mxu0 %v1629
  %v1671 = vpop.f32.mrf.mxu0
  %v1672 = vadd.f32 %v1604, %v1671
  %v1673 = vpop.f32.mrf.mxu0
  %v1674 = vadd.f32 %v1604, %v1673
  %1675 = vmatmul.bf16.gmra.mxu0 %v1632
  %v1676 = vpop.f32.mrf.mxu0
  %v1677 = vadd.f32 %v1604, %v1676
  %v1678 = vpop.f32.mrf.mxu0
  %v1679 = vadd.f32 %v1604, %v1678
  %1680 = vmatmul.bf16.gmra.mxu0 %v1635
  %v1681 = vpop.f32.mrf.mxu0
  %v1682 = vadd.f32 %v1604, %v1681
  %v1683 = vpop.f32.mrf.mxu0
  %v1684 = vadd.f32 %v1604, %v1683
  %1685 = vdwg.mxu0
  %v1686 = vmax.f32 %v1647, 0.0
  %v1687 = vmax.f32 %v1649, 0.0
  %v1688 = vmax.f32 %v1652, 0.0
  %v1689 = vmax.f32 %v1654, 0.0
  %v1690 = vmax.f32 %v1657, 0.0
  %v1691 = vmax.f32 %v1659, 0.0
  %v1692 = vmax.f32 %v1662, 0.0
  %v1693 = vmax.f32 %v1664, 0.0
  %v1694 = vmax.f32 %v1667, 0.0
  %v1695 = vmax.f32 %v1669, 0.0
  %v1696 = vmax.f32 %v1672, 0.0
  %v1697 = vmax.f32 %v1674, 0.0
  %v1698 = vmax.f32 %v1677, 0.0
  %v1699 = vmax.f32 %v1679, 0.0
  %v1700 = vmax.f32 %v1682, 0.0
  %v1701 = vmax.f32 %v1684, 0.0
  %v1702 = vld [vmem:[%s10] sm:$0xf]
  %v1703 = vld [vmem:[%s10 + $0x4] sm:$0xf]
  %v1704 = vld [vmem:[%s10 + $0x8] sm:$0xf]
  %v1705 = vld [vmem:[%s10 + $0xc] sm:$0xf]
  %v1706 = vpack.c.bf16 %v1687, %v1686
  %v1707 = vpack.c.bf16 %v1689, %v1688
  %v1708 = vpack.c.bf16 %v1691, %v1690
  %v1709 = vpack.c.bf16 %v1693, %v1692
  %v1710 = vpack.c.bf16 %v1695, %v1694
  %v1711 = vpack.c.bf16 %v1697, %v1696
  %v1712 = vpack.c.bf16 %v1699, %v1698
  %v1713 = vpack.c.bf16 %v1701, %v1700
  %v1714 = vld [vmem:[%s11] sm:$0x1]
  %v1716 = vperm.slane %v1714, 0
  %v1722 = vunpack.c.l.b16 %v1702
  %v1723 = vunpack.c.l.b16 %v1703
  %v1724 = vunpack.c.l.b16 %v1704
  %v1725 = vunpack.c.l.b16 %v1705
  %v1726 = vpack.c.b16 %v1723, %v1722
  %v1727 = vpack.c.b16 %v1725, %v1724
  %vm1730 = vcmask 261120
  %v1732 = vsel %vm1730, %v1706, 0
  %v1735 = vsel %vm1730, %v1707, 0
  %v1738 = vsel %vm1730, %v1708, 0
  %v1741 = vsel %vm1730, %v1709, 0
  %v1744 = vsel %vm1730, %v1710, 0
  %v1747 = vsel %vm1730, %v1711, 0
  %v1750 = vsel %vm1730, %v1712, 0
  %v1753 = vsel %vm1730, %v1713, 0
  %1755 = vmatpush.bf16.msra.mxu0 0
  %1756 = vmatpush.bf16.msra.mxu0 0
  %1757 = vmatpush.bf16.msra.mxu0 0
  %1758 = vmatpush.bf16.msra.mxu0 0
  %1759 = vmatpush.bf16.msra.mxu0 0
  %1760 = vmatpush.bf16.msra.mxu0 0
  %1761 = vmatpush.bf16.msra.mxu0 %v1727
  %1762 = vmatpush.bf16.msra.mxu0 %v1726
  %1763 = vmatmul.bf16.gmra.mxu0 %v1732
  %v1764 = vpop.f32.mrf.mxu0
  %v1765 = vadd.f32 %v1716, %v1764
  %v1766 = vpop.f32.mrf.mxu0
  %v1767 = vadd.f32 %v1716, %v1766
  %1768 = vmatmul.bf16.gmra.mxu0 %v1735
  %v1769 = vpop.f32.mrf.mxu0
  %v1770 = vadd.f32 %v1716, %v1769
  %v1771 = vpop.f32.mrf.mxu0
  %v1772 = vadd.f32 %v1716, %v1771
  %1773 = vmatmul.bf16.gmra.mxu0 %v1738
  %v1774 = vpop.f32.mrf.mxu0
  %v1775 = vadd.f32 %v1716, %v1774
  %v1776 = vpop.f32.mrf.mxu0
  %v1777 = vadd.f32 %v1716, %v1776
  %1778 = vmatmul.bf16.gmra.mxu0 %v1741
  %v1779 = vpop.f32.mrf.mxu0
  %v1780 = vadd.f32 %v1716, %v1779
  %v1781 = vpop.f32.mrf.mxu0
  %v1782 = vadd.f32 %v1716, %v1781
  %1783 = vmatmul.bf16.gmra.mxu0 %v1744
  %v1784 = vpop.f32.mrf.mxu0
  %v1785 = vadd.f32 %v1716, %v1784
  %v1786 = vpop.f32.mrf.mxu0
  %v1787 = vadd.f32 %v1716, %v1786
  %1788 = vmatmul.bf16.gmra.mxu0 %v1747
  %v1789 = vpop.f32.mrf.mxu0
  %v1790 = vadd.f32 %v1716, %v1789
  %v1791 = vpop.f32.mrf.mxu0
  %v1792 = vadd.f32 %v1716, %v1791
  %1793 = vmatmul.bf16.gmra.mxu0 %v1750
  %v1794 = vpop.f32.mrf.mxu0
  %v1795 = vadd.f32 %v1716, %v1794
  %v1796 = vpop.f32.mrf.mxu0
  %v1797 = vadd.f32 %v1716, %v1796
  %1798 = vmatmul.bf16.gmra.mxu0 %v1753
  %v1799 = vpop.f32.mrf.mxu0
  %v1800 = vadd.f32 %v1716, %v1799
  %v1801 = vpop.f32.mrf.mxu0
  %v1802 = vadd.f32 %v1716, %v1801
  %1803 = vdwg.mxu0
  %1804 = vst.msk [vmem:[%s12] sm:$0xff] %vm1023, %v1765
  %1805 = vst.msk [vmem:[%s12 + $0x8] sm:$0xff] %vm1023, %v1767
  %1806 = vst.msk [vmem:[%s12 + $0x10] sm:$0xff] %vm1023, %v1770
  %1807 = vst.msk [vmem:[%s12 + $0x18] sm:$0xff] %vm1023, %v1772
  %1808 = vst.msk [vmem:[%s12 + $0x20] sm:$0xff] %vm1023, %v1775
  %1809 = vst.msk [vmem:[%s12 + $0x28] sm:$0xff] %vm1023, %v1777
  %1810 = vst.msk [vmem:[%s12 + $0x30] sm:$0xff] %vm1023, %v1780
  %1811 = vst.msk [vmem:[%s12 + $0x38] sm:$0xff] %vm1023, %v1782
  %1812 = vst.msk [vmem:[%s12 + $0x40] sm:$0xff] %vm1023, %v1785
  %1813 = vst.msk [vmem:[%s12 + $0x48] sm:$0xff] %vm1023, %v1787
  %1814 = vst.msk [vmem:[%s12 + $0x50] sm:$0xff] %vm1023, %v1790
  %1815 = vst.msk [vmem:[%s12 + $0x58] sm:$0xff] %vm1023, %v1792
  %1816 = vst.msk [vmem:[%s12 + $0x60] sm:$0xff] %vm1023, %v1795
  %1817 = vst.msk [vmem:[%s12 + $0x68] sm:$0xff] %vm1023, %v1797
  %1818 = vst.msk [vmem:[%s12 + $0x70] sm:$0xff] %vm1023, %v1800
  %1819 = vst.msk [vmem:[%s12 + $0x78] sm:$0xff] %vm1023, %v1802
  // Predicated region
  $region50: #{tpu_custom_call.1} parent=0 // pred_check
    _
  $region51: #{tpu_custom_call.1} parent=0 // pred_check_branch
    %1821 = sbr.rel (0) target = $region53
  $region52: #{tpu_custom_call.1} parent=0 // pred_region
    _
  $region53: #{tpu_custom_call.1} parent=0 // pred_fallthru
    _
  // Predicated region
  $region54: #{tpu_custom_call.1} parent=0 // pred_check
    _
  $region55: #{tpu_custom_call.1} parent=0 // pred_check_branch
    %1823 = sbr.rel (0) target = $region57
  $region56: #{tpu_custom_call.1} parent=0 // pred_region
    _
  $region57: #{tpu_custom_call.1} parent=0 // pred_fallthru
    _

</llo_original>
